<compile_context>
chip_gen: v6e
topology: v6e:2x2x1
jax: 0.10.0
libtpu: 0.0.40
codegen_flags: <defaults>
</compile_context>

<pallas_src>
import functools

import jax
import jax.numpy as jnp
from jax import lax
from jax.experimental import pallas as pl
from jax.experimental.pallas import tpu as pltpu

C_IN, C_OUT, KH, KW = 3, 6, 3, 3
K_TAPS = C_IN * KH * KW          # 27
K_AUG = K_TAPS + 1               # +1 ones-row for the folded-in bias


def _conv2d_mxu_kernel(w_ref, x_ref, o_ref, patch_ref, *, width):
    """One grid step: nb images, full conv as one MXU dot per image.

    w_ref:     (C_OUT, 28)              VMEM  weights in (kh,kw,ic) order + bias col
    x_ref:     (nb, C_IN, HWP_pad)      VMEM  row-major flattened, lane-padded images
    o_ref:     (nb, C_OUT, L_pad)       VMEM  lane-dense "wide" output (extra cols dropped later)
    patch_ref: (28, L_pad)              VMEM  scratch: im2col patch + ones row
    """
    nb = x_ref.shape[0]
    L = o_ref.shape[2]  # lane-padded output width (256 here)

    # Constant ones row -> bias comes out of the matmul itself.
    patch_ref[K_TAPS:K_AUG, :] = jnp.ones((1, L), dtype=patch_ref.dtype)

    for bi in range(nb):
        # Build the im2col patch 3 channels at a time: one contiguous
        # 3-sublane x 256-lane copy per (kh, kw) tap (9 copies per image).
        for kh in range(KH):
            for kw in range(KW):
                t = kh * KW + kw
                off = kh * width + kw
                patch_ref[C_IN * t:C_IN * (t + 1), :] = x_ref[bi, :, off:off + L]

        # Entire reduction on the MXU: (C_OUT, 28) @ (28, L_pad) -> (C_OUT, L_pad),
        # f32 accumulation, HIGHEST precision (MXU idle at K=28, so it is free).
        acc = jnp.dot(w_ref[...], patch_ref[...],
                      preferred_element_type=jnp.float32,
                      precision=lax.Precision.HIGHEST)
        o_ref[bi] = acc.astype(o_ref.dtype)


def _pick_num_steps(n):
    """1 grid step on single-TC v5e/v6e; 2 parallel steps only on dual-TC v7x."""
    if n < 2 or n % 2 != 0:
        return 1
    try:
        kind = jax.devices()[0].device_kind.lower()
    except Exception:  # pragma: no cover - defensive; default to the safe choice
        kind = ""
    if "v7" in kind or "7x" in kind:
        return 2
    return 1


def my_net_forward(x, w, b):
    """Pallas implementation of MyNet.forward (valid 3x3 conv, stride 1)."""
    N, C, H, W = x.shape
    assert C == C_IN
    OH, OW = H - KH + 1, W - KW + 1
    L = OH * W                                   # true flattened output width (224)
    L_pad = ((L + 127) // 128) * 128             # lane-dense, unmasked stores (256)
    max_off = (KH - 1) * W + (KW - 1)            # largest window offset (34)
    hwp_min = max_off + L_pad                    # every off:off+L_pad slice in bounds (290)
    HWP_pad = ((hwp_min + 127) // 128) * 128     # 384

    # Wrapper-side layout plumbing (not compute).  If this conv runs repeatedly,
    # keep x pre-flattened/padded and consume the padded (N, C_OUT, L_pad) output
    # downstream to avoid these extra small XLA dispatches.
    x_flat = jnp.pad(x.reshape(N, C_IN, H * W),
                     ((0, 0), (0, 0), (0, HWP_pad - H * W)))
    # (kh, kw, ic) flattening to match the 3-channel-at-a-time patch rows,
    # with the bias folded in as a trailing column (K = 28).
    w_mat = w.transpose(0, 2, 3, 1).reshape(C_OUT, K_TAPS)
    w_aug = jnp.concatenate([w_mat, b.reshape(C_OUT, 1)], axis=1)

    num_steps = _pick_num_steps(N)
    nb = N // num_steps

    kernel = functools.partial(_conv2d_mxu_kernel, width=W)

    o_wide = pl.pallas_call(
        kernel,
        out_shape=jax.ShapeDtypeStruct((N, C_OUT, L_pad), x.dtype),
        grid_spec=pltpu.PrefetchScalarGridSpec(
            num_scalar_prefetch=0,
            grid=(num_steps,),
            in_specs=[
                pl.BlockSpec((C_OUT, K_AUG), lambda i: (0, 0)),          # weights+bias
                pl.BlockSpec((nb, C_IN, HWP_pad), lambda i: (i, 0, 0)),  # batch chunk
            ],
            out_specs=pl.BlockSpec((nb, C_OUT, L_pad), lambda i: (i, 0, 0)),
            scratch_shapes=[pltpu.VMEM((K_AUG, L_pad), x.dtype)],
        ),
        compiler_params=pltpu.CompilerParams(
            dimension_semantics=("parallel",)),
    )(w_aug, x_flat)

    # Drop lane padding and wrap-around columns (ow >= OW), restore NCHW — layout only.
    return o_wide[..., :L].reshape(N, C_OUT, OH, W)[..., :OW]


if __name__ == "__main__":
    key = jax.random.PRNGKey(0)
    kx, kw_key, kb_key = jax.random.split(key, 3)

    N, H, W = 2, 16, 16
    x = jax.random.normal(kx, (N, C_IN, H, W), dtype=jnp.float32)

    # Deterministic parameter init (same shapes / uniform bound as nn.Conv2d default).
    fan_in = C_IN * KH * KW
    bound = 1.0 / (fan_in ** 0.5)
    w = jax.random.uniform(kw_key, (C_OUT, C_IN, KH, KW),
                           minval=-bound, maxval=bound, dtype=jnp.float32)
    b = jax.random.uniform(kb_key, (C_OUT,),
                           minval=-bound, maxval=bound, dtype=jnp.float32)

    out = jax.block_until_ready(my_net_forward(x, w, b))

    # Reference check against XLA's convolution (glue only, not the kernel).
    ref = jax.lax.conv_general_dilated(
        x, w, window_strides=(1, 1), padding="VALID",
        dimension_numbers=("NCHW", "OIHW", "NCHW"),
        precision=lax.Precision.HIGHEST) + b.reshape(1, C_OUT, 1, 1)

    assert out.shape == (N, C_OUT, H - KH + 1, W - KW + 1)
    assert jnp.allclose(out, ref, atol=5e-5, rtol=5e-5), "mismatch vs lax.conv reference"

    print("KERNEL_OK")
</pallas_src>

<mosaic_0001>
module attributes {stable_mosaic.version = 11 : i64} {
  func.func @_conv2d_mxu_kernel(%arg0: i32, %arg1: memref<6x28xf32, #tpu.memory_space<vmem>>, %arg2: memref<2x3x384xf32, #tpu.memory_space<vmem>>, %arg3: memref<2x6x256xf32, #tpu.memory_space<vmem>>, %arg4: memref<28x256xf32, #tpu.memory_space<vmem>>) attributes {dimension_semantics = [#tpu.dimension_semantics<parallel>], iteration_bounds = array<i64: 1>, scalar_prefetch = 0 : i64, scratch_operands = 1 : i64, tpu.core_type = #tpu.core_type<tc>, window_params = [{pipeline_mode = #tpu.pipeline_mode<synchronous>, transform_indices = @transform_0, window_bounds = array<i64: 6, 28>}, {transform_indices = @transform_1, window_bounds = array<i64: 2, 3, 384>}, {transform_indices = @transform_2, window_bounds = array<i64: 2, 6, 256>}]} {
    %cst = arith.constant 1.000000e+00 : f32
    %0 = vector.broadcast %cst : f32 to vector<1x256xf32>
    %c27 = arith.constant 27 : index
    %c0 = arith.constant 0 : index
    %1 = vector.load %arg4[%c27, %c0] : memref<28x256xf32, #tpu.memory_space<vmem>>, vector<1x256xf32>
    tpu.vector_store %arg4[%c27, %c0], %0 {strides = array<i32>} : memref<28x256xf32, #tpu.memory_space<vmem>>, vector<1x256xf32>,
    %c0_0 = arith.constant 0 : index
    %c0_1 = arith.constant 0 : index
    %c0_2 = arith.constant 0 : index
    %2 = vector.load %arg2[%c0_0, %c0_1, %c0_2] : memref<2x3x384xf32, #tpu.memory_space<vmem>>, vector<1x3x256xf32>
    %3 = vector.shape_cast %2 : vector<1x3x256xf32> to vector<3x256xf32>
    %c0_3 = arith.constant 0 : index
    %c0_4 = arith.constant 0 : index
    %4 = vector.load %arg4[%c0_3, %c0_4] : memref<28x256xf32, #tpu.memory_space<vmem>>, vector<3x256xf32>
    tpu.vector_store %arg4[%c0_3, %c0_4], %3 {strides = array<i32>} : memref<28x256xf32, #tpu.memory_space<vmem>>, vector<3x256xf32>,
    %c0_5 = arith.constant 0 : index
    %c0_6 = arith.constant 0 : index
    %c1 = arith.constant 1 : index
    %5 = vector.load %arg2[%c0_5, %c0_6, %c1] : memref<2x3x384xf32, #tpu.memory_space<vmem>>, vector<1x3x256xf32>
    %6 = vector.shape_cast %5 : vector<1x3x256xf32> to vector<3x256xf32>
    %c3 = arith.constant 3 : index
    %c0_7 = arith.constant 0 : index
    %7 = vector.load %arg4[%c3, %c0_7] : memref<28x256xf32, #tpu.memory_space<vmem>>, vector<3x256xf32>
    tpu.vector_store %arg4[%c3, %c0_7], %6 {strides = array<i32>} : memref<28x256xf32, #tpu.memory_space<vmem>>, vector<3x256xf32>,
    %c0_8 = arith.constant 0 : index
    %c0_9 = arith.constant 0 : index
    %c2 = arith.constant 2 : index
    %8 = vector.load %arg2[%c0_8, %c0_9, %c2] : memref<2x3x384xf32, #tpu.memory_space<vmem>>, vector<1x3x256xf32>
    %9 = vector.shape_cast %8 : vector<1x3x256xf32> to vector<3x256xf32>
    %c6 = arith.constant 6 : index
    %c0_10 = arith.constant 0 : index
    %10 = vector.load %arg4[%c6, %c0_10] : memref<28x256xf32, #tpu.memory_space<vmem>>, vector<3x256xf32>
    tpu.vector_store %arg4[%c6, %c0_10], %9 {strides = array<i32>} : memref<28x256xf32, #tpu.memory_space<vmem>>, vector<3x256xf32>,
    %c0_11 = arith.constant 0 : index
    %c0_12 = arith.constant 0 : index
    %c16 = arith.constant 16 : index
    %11 = vector.load %arg2[%c0_11, %c0_12, %c16] : memref<2x3x384xf32, #tpu.memory_space<vmem>>, vector<1x3x256xf32>
    %12 = vector.shape_cast %11 : vector<1x3x256xf32> to vector<3x256xf32>
    %c9 = arith.constant 9 : index
    %c0_13 = arith.constant 0 : index
    %13 = vector.load %arg4[%c9, %c0_13] : memref<28x256xf32, #tpu.memory_space<vmem>>, vector<3x256xf32>
    tpu.vector_store %arg4[%c9, %c0_13], %12 {strides = array<i32>} : memref<28x256xf32, #tpu.memory_space<vmem>>, vector<3x256xf32>,
    %c0_14 = arith.constant 0 : index
    %c0_15 = arith.constant 0 : index
    %c17 = arith.constant 17 : index
    %14 = vector.load %arg2[%c0_14, %c0_15, %c17] : memref<2x3x384xf32, #tpu.memory_space<vmem>>, vector<1x3x256xf32>
    %15 = vector.shape_cast %14 : vector<1x3x256xf32> to vector<3x256xf32>
    %c12 = arith.constant 12 : index
    %c0_16 = arith.constant 0 : index
    %16 = vector.load %arg4[%c12, %c0_16] : memref<28x256xf32, #tpu.memory_space<vmem>>, vector<3x256xf32>
    tpu.vector_store %arg4[%c12, %c0_16], %15 {strides = array<i32>} : memref<28x256xf32, #tpu.memory_space<vmem>>, vector<3x256xf32>,
    %c0_17 = arith.constant 0 : index
    %c0_18 = arith.constant 0 : index
    %c18 = arith.constant 18 : index
    %17 = vector.load %arg2[%c0_17, %c0_18, %c18] : memref<2x3x384xf32, #tpu.memory_space<vmem>>, vector<1x3x256xf32>
    %18 = vector.shape_cast %17 : vector<1x3x256xf32> to vector<3x256xf32>
    %c15 = arith.constant 15 : index
    %c0_19 = arith.constant 0 : index
    %19 = vector.load %arg4[%c15, %c0_19] : memref<28x256xf32, #tpu.memory_space<vmem>>, vector<3x256xf32>
    tpu.vector_store %arg4[%c15, %c0_19], %18 {strides = array<i32>} : memref<28x256xf32, #tpu.memory_space<vmem>>, vector<3x256xf32>,
    %c0_20 = arith.constant 0 : index
    %c0_21 = arith.constant 0 : index
    %c32 = arith.constant 32 : index
    %20 = vector.load %arg2[%c0_20, %c0_21, %c32] : memref<2x3x384xf32, #tpu.memory_space<vmem>>, vector<1x3x256xf32>
    %21 = vector.shape_cast %20 : vector<1x3x256xf32> to vector<3x256xf32>
    %c18_22 = arith.constant 18 : index
    %c0_23 = arith.constant 0 : index
    %22 = vector.load %arg4[%c18_22, %c0_23] : memref<28x256xf32, #tpu.memory_space<vmem>>, vector<3x256xf32>
    tpu.vector_store %arg4[%c18_22, %c0_23], %21 {strides = array<i32>} : memref<28x256xf32, #tpu.memory_space<vmem>>, vector<3x256xf32>,
    %c0_24 = arith.constant 0 : index
    %c0_25 = arith.constant 0 : index
    %c33 = arith.constant 33 : index
    %23 = vector.load %arg2[%c0_24, %c0_25, %c33] : memref<2x3x384xf32, #tpu.memory_space<vmem>>, vector<1x3x256xf32>
    %24 = vector.shape_cast %23 : vector<1x3x256xf32> to vector<3x256xf32>
    %c21 = arith.constant 21 : index
    %c0_26 = arith.constant 0 : index
    %25 = vector.load %arg4[%c21, %c0_26] : memref<28x256xf32, #tpu.memory_space<vmem>>, vector<3x256xf32>
    tpu.vector_store %arg4[%c21, %c0_26], %24 {strides = array<i32>} : memref<28x256xf32, #tpu.memory_space<vmem>>, vector<3x256xf32>,
    %c0_27 = arith.constant 0 : index
    %c0_28 = arith.constant 0 : index
    %c34 = arith.constant 34 : index
    %26 = vector.load %arg2[%c0_27, %c0_28, %c34] : memref<2x3x384xf32, #tpu.memory_space<vmem>>, vector<1x3x256xf32>
    %27 = vector.shape_cast %26 : vector<1x3x256xf32> to vector<3x256xf32>
    %c24 = arith.constant 24 : index
    %c0_29 = arith.constant 0 : index
    %28 = vector.load %arg4[%c24, %c0_29] : memref<28x256xf32, #tpu.memory_space<vmem>>, vector<3x256xf32>
    tpu.vector_store %arg4[%c24, %c0_29], %27 {strides = array<i32>} : memref<28x256xf32, #tpu.memory_space<vmem>>, vector<3x256xf32>,
    %c0_30 = arith.constant 0 : index
    %c0_31 = arith.constant 0 : index
    %29 = vector.load %arg1[%c0_30, %c0_31] : memref<6x28xf32, #tpu.memory_space<vmem>>, vector<6x28xf32>
    %c0_32 = arith.constant 0 : index
    %c0_33 = arith.constant 0 : index
    %30 = vector.load %arg4[%c0_32, %c0_33] : memref<28x256xf32, #tpu.memory_space<vmem>>, vector<28x256xf32>
    %cst_34 = arith.constant dense<0.000000e+00> : vector<6x256xf32>
    %31 = tpu.matmul %29, %30, %cst_34 {dimension_numbers = #tpu.dot_dimension_numbers<[1], [0], [0], [1], [0, 0, 1, 1], [], []>, precision = #tpu.contract_precision<fp32>} : vector<6x28xf32>, vector<28x256xf32>, vector<6x256xf32> -> vector<6x256xf32>
    %c0_35 = arith.constant 0 : index
    %c0_36 = arith.constant 0 : index
    %c0_37 = arith.constant 0 : index
    %32 = vector.load %arg3[%c0_35, %c0_36, %c0_37] : memref<2x6x256xf32, #tpu.memory_space<vmem>>, vector<1x6x256xf32>
    %33 = vector.shape_cast %32 : vector<1x6x256xf32> to vector<6x256xf32>
    %34 = vector.shape_cast %31 : vector<6x256xf32> to vector<1x6x256xf32>
    tpu.vector_store %arg3[%c0_35, %c0_36, %c0_37], %34 {strides = array<i32>} : memref<2x6x256xf32, #tpu.memory_space<vmem>>, vector<1x6x256xf32>,
    %c1_38 = arith.constant 1 : index
    %c0_39 = arith.constant 0 : index
    %c0_40 = arith.constant 0 : index
    %35 = vector.load %arg2[%c1_38, %c0_39, %c0_40] : memref<2x3x384xf32, #tpu.memory_space<vmem>>, vector<1x3x256xf32>
    %36 = vector.shape_cast %35 : vector<1x3x256xf32> to vector<3x256xf32>
    %c0_41 = arith.constant 0 : index
    %c0_42 = arith.constant 0 : index
    %37 = vector.load %arg4[%c0_41, %c0_42] : memref<28x256xf32, #tpu.memory_space<vmem>>, vector<3x256xf32>
    tpu.vector_store %arg4[%c0_41, %c0_42], %36 {strides = array<i32>} : memref<28x256xf32, #tpu.memory_space<vmem>>, vector<3x256xf32>,
    %c1_43 = arith.constant 1 : index
    %c0_44 = arith.constant 0 : index
    %c1_45 = arith.constant 1 : index
    %38 = vector.load %arg2[%c1_43, %c0_44, %c1_45] : memref<2x3x384xf32, #tpu.memory_space<vmem>>, vector<1x3x256xf32>
    %39 = vector.shape_cast %38 : vector<1x3x256xf32> to vector<3x256xf32>
    %c3_46 = arith.constant 3 : index
    %c0_47 = arith.constant 0 : index
    %40 = vector.load %arg4[%c3_46, %c0_47] : memref<28x256xf32, #tpu.memory_space<vmem>>, vector<3x256xf32>
    tpu.vector_store %arg4[%c3_46, %c0_47], %39 {strides = array<i32>} : memref<28x256xf32, #tpu.memory_space<vmem>>, vector<3x256xf32>,
    %c1_48 = arith.constant 1 : index
    %c0_49 = arith.constant 0 : index
    %c2_50 = arith.constant 2 : index
    %41 = vector.load %arg2[%c1_48, %c0_49, %c2_50] : memref<2x3x384xf32, #tpu.memory_space<vmem>>, vector<1x3x256xf32>
    %42 = vector.shape_cast %41 : vector<1x3x256xf32> to vector<3x256xf32>
    %c6_51 = arith.constant 6 : index
    %c0_52 = arith.constant 0 : index
    %43 = vector.load %arg4[%c6_51, %c0_52] : memref<28x256xf32, #tpu.memory_space<vmem>>, vector<3x256xf32>
    tpu.vector_store %arg4[%c6_51, %c0_52], %42 {strides = array<i32>} : memref<28x256xf32, #tpu.memory_space<vmem>>, vector<3x256xf32>,
    %c1_53 = arith.constant 1 : index
    %c0_54 = arith.constant 0 : index
    %c16_55 = arith.constant 16 : index
    %44 = vector.load %arg2[%c1_53, %c0_54, %c16_55] : memref<2x3x384xf32, #tpu.memory_space<vmem>>, vector<1x3x256xf32>
    %45 = vector.shape_cast %44 : vector<1x3x256xf32> to vector<3x256xf32>
    %c9_56 = arith.constant 9 : index
    %c0_57 = arith.constant 0 : index
    %46 = vector.load %arg4[%c9_56, %c0_57] : memref<28x256xf32, #tpu.memory_space<vmem>>, vector<3x256xf32>
    tpu.vector_store %arg4[%c9_56, %c0_57], %45 {strides = array<i32>} : memref<28x256xf32, #tpu.memory_space<vmem>>, vector<3x256xf32>,
    %c1_58 = arith.constant 1 : index
    %c0_59 = arith.constant 0 : index
    %c17_60 = arith.constant 17 : index
    %47 = vector.load %arg2[%c1_58, %c0_59, %c17_60] : memref<2x3x384xf32, #tpu.memory_space<vmem>>, vector<1x3x256xf32>
    %48 = vector.shape_cast %47 : vector<1x3x256xf32> to vector<3x256xf32>
    %c12_61 = arith.constant 12 : index
    %c0_62 = arith.constant 0 : index
    %49 = vector.load %arg4[%c12_61, %c0_62] : memref<28x256xf32, #tpu.memory_space<vmem>>, vector<3x256xf32>
    tpu.vector_store %arg4[%c12_61, %c0_62], %48 {strides = array<i32>} : memref<28x256xf32, #tpu.memory_space<vmem>>, vector<3x256xf32>,
    %c1_63 = arith.constant 1 : index
    %c0_64 = arith.constant 0 : index
    %c18_65 = arith.constant 18 : index
    %50 = vector.load %arg2[%c1_63, %c0_64, %c18_65] : memref<2x3x384xf32, #tpu.memory_space<vmem>>, vector<1x3x256xf32>
    %51 = vector.shape_cast %50 : vector<1x3x256xf32> to vector<3x256xf32>
    %c15_66 = arith.constant 15 : index
    %c0_67 = arith.constant 0 : index
    %52 = vector.load %arg4[%c15_66, %c0_67] : memref<28x256xf32, #tpu.memory_space<vmem>>, vector<3x256xf32>
    tpu.vector_store %arg4[%c15_66, %c0_67], %51 {strides = array<i32>} : memref<28x256xf32, #tpu.memory_space<vmem>>, vector<3x256xf32>,
    %c1_68 = arith.constant 1 : index
    %c0_69 = arith.constant 0 : index
    %c32_70 = arith.constant 32 : index
    %53 = vector.load %arg2[%c1_68, %c0_69, %c32_70] : memref<2x3x384xf32, #tpu.memory_space<vmem>>, vector<1x3x256xf32>
    %54 = vector.shape_cast %53 : vector<1x3x256xf32> to vector<3x256xf32>
    %c18_71 = arith.constant 18 : index
    %c0_72 = arith.constant 0 : index
    %55 = vector.load %arg4[%c18_71, %c0_72] : memref<28x256xf32, #tpu.memory_space<vmem>>, vector<3x256xf32>
    tpu.vector_store %arg4[%c18_71, %c0_72], %54 {strides = array<i32>} : memref<28x256xf32, #tpu.memory_space<vmem>>, vector<3x256xf32>,
    %c1_73 = arith.constant 1 : index
    %c0_74 = arith.constant 0 : index
    %c33_75 = arith.constant 33 : index
    %56 = vector.load %arg2[%c1_73, %c0_74, %c33_75] : memref<2x3x384xf32, #tpu.memory_space<vmem>>, vector<1x3x256xf32>
    %57 = vector.shape_cast %56 : vector<1x3x256xf32> to vector<3x256xf32>
    %c21_76 = arith.constant 21 : index
    %c0_77 = arith.constant 0 : index
    %58 = vector.load %arg4[%c21_76, %c0_77] : memref<28x256xf32, #tpu.memory_space<vmem>>, vector<3x256xf32>
    tpu.vector_store %arg4[%c21_76, %c0_77], %57 {strides = array<i32>} : memref<28x256xf32, #tpu.memory_space<vmem>>, vector<3x256xf32>,
    %c1_78 = arith.constant 1 : index
    %c0_79 = arith.constant 0 : index
    %c34_80 = arith.constant 34 : index
    %59 = vector.load %arg2[%c1_78, %c0_79, %c34_80] : memref<2x3x384xf32, #tpu.memory_space<vmem>>, vector<1x3x256xf32>
    %60 = vector.shape_cast %59 : vector<1x3x256xf32> to vector<3x256xf32>
    %c24_81 = arith.constant 24 : index
    %c0_82 = arith.constant 0 : index
    %61 = vector.load %arg4[%c24_81, %c0_82] : memref<28x256xf32, #tpu.memory_space<vmem>>, vector<3x256xf32>
    tpu.vector_store %arg4[%c24_81, %c0_82], %60 {strides = array<i32>} : memref<28x256xf32, #tpu.memory_space<vmem>>, vector<3x256xf32>,
    %c0_83 = arith.constant 0 : index
    %c0_84 = arith.constant 0 : index
    %62 = vector.load %arg1[%c0_83, %c0_84] : memref<6x28xf32, #tpu.memory_space<vmem>>, vector<6x28xf32>
    %c0_85 = arith.constant 0 : index
    %c0_86 = arith.constant 0 : index
    %63 = vector.load %arg4[%c0_85, %c0_86] : memref<28x256xf32, #tpu.memory_space<vmem>>, vector<28x256xf32>
    %cst_87 = arith.constant dense<0.000000e+00> : vector<6x256xf32>
    %64 = tpu.matmul %62, %63, %cst_87 {dimension_numbers = #tpu.dot_dimension_numbers<[1], [0], [0], [1], [0, 0, 1, 1], [], []>, precision = #tpu.contract_precision<fp32>} : vector<6x28xf32>, vector<28x256xf32>, vector<6x256xf32> -> vector<6x256xf32>
    %c1_88 = arith.constant 1 : index
    %c0_89 = arith.constant 0 : index
    %c0_90 = arith.constant 0 : index
    %65 = vector.load %arg3[%c1_88, %c0_89, %c0_90] : memref<2x6x256xf32, #tpu.memory_space<vmem>>, vector<1x6x256xf32>
    %66 = vector.shape_cast %65 : vector<1x6x256xf32> to vector<6x256xf32>
    %67 = vector.shape_cast %64 : vector<6x256xf32> to vector<1x6x256xf32>
    tpu.vector_store %arg3[%c1_88, %c0_89, %c0_90], %67 {strides = array<i32>} : memref<2x6x256xf32, #tpu.memory_space<vmem>>, vector<1x6x256xf32>,
    return
  }
  func.func @transform_0(%arg0: i32) -> (i32, i32) {
    %c0_i32 = arith.constant 0 : i32
    %c0_i32_0 = arith.constant 0 : i32
    %c0_i32_1 = arith.constant 0 : i32
    return %c0_i32, %c0_i32_0 : i32, i32
  }
  func.func @transform_1(%arg0: i32) -> (i32, i32, i32) {
    %c0_i32 = arith.constant 0 : i32
    %c0_i32_0 = arith.constant 0 : i32
    %c0_i32_1 = arith.constant 0 : i32
    return %arg0, %c0_i32, %c0_i32_0 : i32, i32, i32
  }
  func.func @transform_2(%arg0: i32) -> (i32, i32, i32) {
    %c0_i32 = arith.constant 0 : i32
    %c0_i32_0 = arith.constant 0 : i32
    %c0_i32_1 = arith.constant 0 : i32
    return %arg0, %c0_i32, %c0_i32_0 : i32, i32, i32
  }
}

</mosaic_0001>

<llo_original>
// kernel: tpu_custom_call.1
$region0: #{tpu_custom_call.1}
  #allocation0 [shape = 'u32[]', space=smem, size = 0x4, offset = 0x4, fixed_abs, tag = 'smem constant byte address 0x4 - core index']
  #allocation1 [shape = 'u32[144,128]{1,0:T(1,128)}', space=vmem, size = 0x12000, scoped, tag = 'internal scratch']
  #allocation2 [shape = 'f32[28,256]{1,0:T(8,128)}', space=vmem, size = 0x8000, scoped, tag = 'scratch operand']
  %s0 = inlined_call_operand.vmem [shape: f32[6,28], index: 0, kind: input, shape index: {}]
  %s1 = inlined_call_operand.vmem [shape: f32[2,3,384], index: 1, kind: input, shape index: {}]
  %s2 = inlined_call_operand.vmem [shape: f32[2,6,256], index: 2, kind: output, shape index: {}]
  %s3 = sld [smem:[#allocation0]]
  $region18: #{tpu_custom_call.1} parent=0
    _
  %s5 = ssub.s32 1, %s3
  %s6 = scalar_select 0, %s5, %s3
  // Predicated region
  $region2: #{tpu_custom_call.1} parent=0 // pred_check
    _
  $region3: #{tpu_custom_call.1} parent=0 // pred_check_branch
    %8 = sbr.rel (0) target = $region5
  $region4: #{tpu_custom_call.1} parent=0 // pred_region
    _
  $region5: #{tpu_custom_call.1} parent=0 // pred_fallthru
    _
  // Predicated region
  $region6: #{tpu_custom_call.1} parent=0 // pred_check
    _
  $region7: #{tpu_custom_call.1} parent=0 // pred_check_branch
    %10 = sbr.rel (0) target = $region9
  $region8: #{tpu_custom_call.1} parent=0 // pred_region
    _
  $region9: #{tpu_custom_call.1} parent=0 // pred_fallthru
    _
  %v11 = vlaneseq
  %vm12 = vcmp.ge.s32.totalorder %v11, 0
  %vm13 = vcmp.lt.s32.totalorder %v11, 256
  %vm14 = vmand %vm12, %vm13
  %s15 = scalar_lea.vmem [#allocation2], 51
  %16 = vst.msk [vmem:[%s15] ss:$8 sm:$0x3] %vm14, 1.0
  %17 = vst.msk [vmem:[%s15] ss:$8 sm:$0x0] %vm14, 1.0
  %v18 = vld [vmem:[%s1] sm:$0x77]
  %v20 = vcombine.high %v18, %v18
  %22 = vst [vmem:[#allocation2] sm:$0x7] %v18
  %23 = vst [vmem:[#allocation2 + $0x8] sm:$0x7] %v20
  %v24 = vld [vmem:[%s1] sm:$0x77]
  %v25 = vld [vmem:[%s1 + $0x8] sm:$0x7]
  %v28 = vcombine.high %v24, %v24
  %v29 = vrot.slane %v24, 5
  %v30 = vrot.slane %v28, 5
  %v31 = vrot.slane %v25, 5
  %32 = vrot.lane.b32.xlu0 %v29, 127
  %v33 = vpop.permute.xlu0 %32
  %34 = vrot.lane.b32.xlu0 %v30, 127
  %v35 = vpop.permute.xlu0 %34
  %36 = vrot.lane.b32.xlu0 %v31, 127
  %v37 = vpop.permute.xlu0 %36
  %vm38 = vcmask 1039360
  %v39 = vsel %vm38, %v33, %v35
  %v40 = vsel %vm38, %v35, %v37
  %43 = vst [vmem:[#allocation2] sm:$0x38] %v39
  %44 = vst [vmem:[#allocation2 + $0x8] sm:$0x38] %v40
  %v45 = vld [vmem:[%s1] sm:$0x77]
  %v46 = vld [vmem:[%s1 + $0x8] sm:$0x7]
  %v49 = vcombine.high %v45, %v45
  %v50 = vrot.slane %v45, 2
  %v51 = vrot.slane %v49, 2
  %v52 = vrot.slane %v46, 2
  %53 = vrot.lane.b32.xlu0 %v50, 126
  %v54 = vpop.permute.xlu0 %53
  %55 = vrot.lane.b32.xlu0 %v51, 126
  %v56 = vpop.permute.xlu0 %55
  %57 = vrot.lane.b32.xlu0 %v52, 126
  %v58 = vpop.permute.xlu0 %57
  %vm59 = vcmask 1031168
  %v60 = vsel %vm59, %v54, %v56
  %v61 = vsel %vm59, %v56, %v58
  %64 = vst [vmem:[#allocation2] sm:$0xc0] %v60
  %65 = vst [vmem:[#allocation2 + $0x8] sm:$0xc0] %v61
  %66 = vst [vmem:[#allocation2 + $0x10] sm:$0x1] %v60
  %67 = vst [vmem:[#allocation2 + $0x18] sm:$0x1] %v61
  %v68 = vld [vmem:[%s1] sm:$0x77]
  %v69 = vld [vmem:[%s1 + $0x8] sm:$0x7]
  %v72 = vcombine.high %v68, %v68
  %v73 = vrot.slane %v68, 7
  %v74 = vrot.slane %v72, 7
  %v75 = vrot.slane %v69, 7
  %76 = vrot.lane.b32.xlu0 %v73, 112
  %v77 = vpop.permute.xlu0 %76
  %78 = vrot.lane.b32.xlu0 %v74, 112
  %v79 = vpop.permute.xlu0 %78
  %80 = vrot.lane.b32.xlu0 %v75, 112
  %v81 = vpop.permute.xlu0 %80
  %vm82 = vcmask 916480
  %v83 = vsel %vm82, %v77, %v79
  %v84 = vsel %vm82, %v79, %v81
  %87 = vst [vmem:[#allocation2 + $0x10] sm:$0xe] %v83
  %88 = vst [vmem:[#allocation2 + $0x18] sm:$0xe] %v84
  %v89 = vld [vmem:[%s1] sm:$0x77]
  %v90 = vld [vmem:[%s1 + $0x8] sm:$0x7]
  %v93 = vcombine.low %v89, %v89
  %v94 = vcombine.low %v90, %v90
  %95 = vrot.lane.b32.xlu0 %v93, 111
  %v96 = vpop.permute.xlu0 %95
  %97 = vrot.lane.b32.xlu0 %v89, 111
  %v98 = vpop.permute.xlu0 %97
  %99 = vrot.lane.b32.xlu0 %v94, 111
  %v100 = vpop.permute.xlu0 %99
  %vm101 = vcmask 908288
  %v102 = vsel %vm101, %v96, %v98
  %v103 = vsel %vm101, %v98, %v100
  %106 = vst [vmem:[#allocation2 + $0x10] sm:$0x70] %v102
  %107 = vst [vmem:[#allocation2 + $0x18] sm:$0x70] %v103
  %v108 = vld [vmem:[%s1] sm:$0x77]
  %v109 = vld [vmem:[%s1 + $0x8] sm:$0x7]
  %v112 = vcombine.high %v108, %v108
  %v113 = vrot.slane %v108, 1
  %v114 = vrot.slane %v112, 1
  %v115 = vrot.slane %v109, 1
  %116 = vrot.lane.b32.xlu0 %v113, 110
  %v117 = vpop.permute.xlu0 %116
  %118 = vrot.lane.b32.xlu0 %v114, 110
  %v119 = vpop.permute.xlu0 %118
  %120 = vrot.lane.b32.xlu0 %v115, 110
  %v121 = vpop.permute.xlu0 %120
  %vm122 = vcmask 900096
  %v123 = vsel %vm122, %v117, %v119
  %v124 = vsel %vm122, %v119, %v121
  %127 = vst [vmem:[#allocation2 + $0x10] sm:$0x80] %v123
  %128 = vst [vmem:[#allocation2 + $0x18] sm:$0x80] %v124
  %129 = vst [vmem:[#allocation2 + $0x20] sm:$0x3] %v123
  %130 = vst [vmem:[#allocation2 + $0x28] sm:$0x3] %v124
  %v131 = vld [vmem:[%s1] sm:$0x77]
  %v132 = vld [vmem:[%s1 + $0x8] sm:$0x7]
  %v135 = vcombine.high %v131, %v131
  %v136 = vrot.slane %v131, 6
  %v137 = vrot.slane %v135, 6
  %v138 = vrot.slane %v132, 6
  %139 = vrot.lane.b32.xlu0 %v136, 96
  %v140 = vpop.permute.xlu0 %139
  %141 = vrot.lane.b32.xlu0 %v137, 96
  %v142 = vpop.permute.xlu0 %141
  %143 = vrot.lane.b32.xlu0 %v138, 96
  %v144 = vpop.permute.xlu0 %143
  %vm145 = vcmask 785408
  %v146 = vsel %vm145, %v140, %v142
  %v147 = vsel %vm145, %v142, %v144
  %150 = vst [vmem:[#allocation2 + $0x20] sm:$0x1c] %v146
  %151 = vst [vmem:[#allocation2 + $0x28] sm:$0x1c] %v147
  %v152 = vld [vmem:[%s1] sm:$0x77]
  %v153 = vld [vmem:[%s1 + $0x8] sm:$0x7]
  %v156 = vcombine.high %v152, %v152
  %v157 = vrot.slane %v152, 3
  %v158 = vrot.slane %v156, 3
  %v159 = vrot.slane %v153, 3
  %160 = vrot.lane.b32.xlu0 %v157, 95
  %v161 = vpop.permute.xlu0 %160
  %162 = vrot.lane.b32.xlu0 %v158, 95
  %v163 = vpop.permute.xlu0 %162
  %164 = vrot.lane.b32.xlu0 %v159, 95
  %v165 = vpop.permute.xlu0 %164
  %vm166 = vcmask 777216
  %v167 = vsel %vm166, %v161, %v163
  %v168 = vsel %vm166, %v163, %v165
  %171 = vst [vmem:[#allocation2 + $0x20] sm:$0xe0] %v167
  %172 = vst [vmem:[#allocation2 + $0x28] sm:$0xe0] %v168
  %v173 = vld [vmem:[%s1] sm:$0x77]
  %v174 = vld [vmem:[%s1 + $0x8] sm:$0x7]
  %v177 = vcombine.high %v173, %v173
  %178 = vrot.lane.b32.xlu0 %v173, 94
  %v179 = vpop.permute.xlu0 %178
  %180 = vrot.lane.b32.xlu0 %v177, 94
  %v181 = vpop.permute.xlu0 %180
  %182 = vrot.lane.b32.xlu0 %v174, 94
  %v183 = vpop.permute.xlu0 %182
  %vm184 = vcmask 769024
  %v185 = vsel %vm184, %v179, %v181
  %v186 = vsel %vm184, %v181, %v183
  %189 = vst [vmem:[#allocation2 + $0x30] sm:$0x7] %v185
  %190 = vst [vmem:[#allocation2 + $0x38] sm:$0x7] %v186
  %v191 = vld [vmem:[%s0] sm:$0x3f]
  %v192 = vld [vmem:[#allocation2] sm:$0xff]
  %v193 = vld [vmem:[#allocation2 + $0x8] sm:$0xff]
  %v194 = vld [vmem:[#allocation2 + $0x10] sm:$0xff]
  %v195 = vld [vmem:[#allocation2 + $0x18] sm:$0xff]
  %v196 = vld [vmem:[#allocation2 + $0x20] sm:$0xff]
  %v197 = vld [vmem:[#allocation2 + $0x28] sm:$0xff]
  %v198 = vld [vmem:[#allocation2 + $0x30] sm:$0xf]
  %v199 = vld [vmem:[#allocation2 + $0x38] sm:$0xf]
  %vm200 = vcmask 228352
  %v202 = vsel %vm200, %v191, 0
  %vm204 = vcmask 1043456
  %v206 = vsel %vm204, %v198, 0
  %v209 = vsel %vm204, %v199, 0
  %211 = vmatprep.subr.mxu0 0.0
  %212 = vmatpush1.msra.mxu0 0.0
  %213 = vmatprep.subr.mxu0 0.0
  %214 = vmatpush1.msra.mxu0 0.0
  %215 = vmatprep.subr.mxu0 0.0
  %216 = vmatpush1.msra.mxu0 0.0
  %217 = vmatprep.subr.mxu0 0.0
  %218 = vmatpush1.msra.mxu0 0.0
  %219 = vmatprep.subr.mxu0 0.0
  %220 = vmatpush1.msra.mxu0 0.0
  %221 = vmatprep.subr.mxu0 0.0
  %222 = vmatpush1.msra.mxu0 0.0
  %223 = vmatprep.subr.mxu0 0.0
  %224 = vmatpush1.msra.mxu0 0.0
  %225 = vmatprep.subr.mxu0 0.0
  %226 = vmatpush1.msra.mxu0 0.0
  %227 = vmatprep.subr.mxu0 0.0
  %228 = vmatpush1.msra.mxu0 0.0
  %229 = vmatprep.subr.mxu0 0.0
  %230 = vmatpush1.msra.mxu0 0.0
  %231 = vmatprep.subr.mxu0 0.0
  %232 = vmatpush1.msra.mxu0 0.0
  %233 = vmatprep.subr.mxu0 0.0
  %234 = vmatpush1.msra.mxu0 0.0
  %v235 = vand.u32 %v209, 4294901760
  %236 = vmatprep.subr.mxu0 %v235
  %v237 = vand.u32 %v206, 4294901760
  %238 = vmatpush1.msra.mxu0 %v237
  %v239 = vand.u32 %v197, 4294901760
  %240 = vmatprep.subr.mxu0 %v239
  %v241 = vand.u32 %v196, 4294901760
  %242 = vmatpush1.msra.mxu0 %v241
  %v243 = vand.u32 %v195, 4294901760
  %244 = vmatprep.subr.mxu0 %v243
  %v245 = vand.u32 %v194, 4294901760
  %246 = vmatpush1.msra.mxu0 %v245
  %v247 = vand.u32 %v193, 4294901760
  %248 = vmatprep.subr.mxu0 %v247
  %v249 = vand.u32 %v192, 4294901760
  %250 = vmatpush1.msra.mxu0 %v249
  %251 = vmatprep.subr.mxu0 0.0
  %252 = vmatpush2.msra.mxu0 0.0
  %253 = vmatprep.subr.mxu0 0.0
  %254 = vmatpush2.msra.mxu0 0.0
  %255 = vmatprep.subr.mxu0 0.0
  %256 = vmatpush2.msra.mxu0 0.0
  %257 = vmatprep.subr.mxu0 0.0
  %258 = vmatpush2.msra.mxu0 0.0
  %259 = vmatprep.subr.mxu0 0.0
  %260 = vmatpush2.msra.mxu0 0.0
  %261 = vmatprep.subr.mxu0 0.0
  %262 = vmatpush2.msra.mxu0 0.0
  %263 = vmatprep.subr.mxu0 0.0
  %264 = vmatpush2.msra.mxu0 0.0
  %265 = vmatprep.subr.mxu0 0.0
  %266 = vmatpush2.msra.mxu0 0.0
  %267 = vmatprep.subr.mxu0 0.0
  %268 = vmatpush2.msra.mxu0 0.0
  %269 = vmatprep.subr.mxu0 0.0
  %270 = vmatpush2.msra.mxu0 0.0
  %271 = vmatprep.subr.mxu0 0.0
  %272 = vmatpush2.msra.mxu0 0.0
  %273 = vmatprep.subr.mxu0 0.0
  %274 = vmatpush2.msra.mxu0 0.0
  %275 = vmatprep.subr.mxu0 0.0
  %276 = vmatpush2.msra.mxu0 0.0
  %277 = vmatprep.subr.mxu0 0.0
  %278 = vmatpush2.msra.mxu0 0.0
  %279 = vmatprep.subr.mxu0 0.0
  %280 = vmatpush2.msra.mxu0 0.0
  %281 = vmatprep.subr.mxu0 0.0
  %282 = vmatpush2.msra.mxu0 0.0
  %283 = vmatprep.mubr.f32.mxu0 0.0
  %v284 = vand.u32 %v202, 4294901760
  %v285 = vsub.f32 %v202, %v284
  %v286 = vand.u32 %v285, 4294901760
  %v287 = vsub.f32 %v285, %v286
  %v288 = vand.u32 %v287, 4294901760
  %289 = vmatmul.mubr.f32.gmra.mxu0 %v288
  %v290 = vpop.f32.mrf.mxu0
  %v291 = vadd.f32 0.0, %v290
  %v292 = vpop.f32.mrf.mxu0
  %v293 = vadd.f32 0.0, %v292
  %294 = vdwg.mxu0
  %295 = vmatprep.subr.mxu0 0.0
  %296 = vmatpush1.msra.mxu0 0.0
  %297 = vmatprep.subr.mxu0 0.0
  %298 = vmatpush1.msra.mxu0 0.0
  %299 = vmatprep.subr.mxu0 0.0
  %300 = vmatpush1.msra.mxu0 0.0
  %301 = vmatprep.subr.mxu0 0.0
  %302 = vmatpush1.msra.mxu0 0.0
  %303 = vmatprep.subr.mxu0 0.0
  %304 = vmatpush1.msra.mxu0 0.0
  %305 = vmatprep.subr.mxu0 0.0
  %306 = vmatpush1.msra.mxu0 0.0
  %307 = vmatprep.subr.mxu0 0.0
  %308 = vmatpush1.msra.mxu0 0.0
  %309 = vmatprep.subr.mxu0 0.0
  %310 = vmatpush1.msra.mxu0 0.0
  %311 = vmatprep.subr.mxu0 0.0
  %312 = vmatpush1.msra.mxu0 0.0
  %313 = vmatprep.subr.mxu0 0.0
  %314 = vmatpush1.msra.mxu0 0.0
  %315 = vmatprep.subr.mxu0 0.0
  %316 = vmatpush1.msra.mxu0 0.0
  %317 = vmatprep.subr.mxu0 0.0
  %318 = vmatpush1.msra.mxu0 0.0
  %v319 = vand.u32 %v209, 4294901760
  %v320 = vsub.f32 %v209, %v319
  %v321 = vand.u32 %v320, 4294901760
  %v322 = vsub.f32 %v320, %v321
  %v323 = vand.u32 %v322, 4294901760
  %324 = vmatprep.subr.mxu0 %v323
  %v325 = vand.u32 %v206, 4294901760
  %v326 = vsub.f32 %v206, %v325
  %v327 = vand.u32 %v326, 4294901760
  %v328 = vsub.f32 %v326, %v327
  %v329 = vand.u32 %v328, 4294901760
  %330 = vmatpush1.msra.mxu0 %v329
  %v331 = vand.u32 %v197, 4294901760
  %v332 = vsub.f32 %v197, %v331
  %v333 = vand.u32 %v332, 4294901760
  %v334 = vsub.f32 %v332, %v333
  %v335 = vand.u32 %v334, 4294901760
  %336 = vmatprep.subr.mxu0 %v335
  %v337 = vand.u32 %v196, 4294901760
  %v338 = vsub.f32 %v196, %v337
  %v339 = vand.u32 %v338, 4294901760
  %v340 = vsub.f32 %v338, %v339
  %v341 = vand.u32 %v340, 4294901760
  %342 = vmatpush1.msra.mxu0 %v341
  %v343 = vand.u32 %v195, 4294901760
  %v344 = vsub.f32 %v195, %v343
  %v345 = vand.u32 %v344, 4294901760
  %v346 = vsub.f32 %v344, %v345
  %v347 = vand.u32 %v346, 4294901760
  %348 = vmatprep.subr.mxu0 %v347
  %v349 = vand.u32 %v194, 4294901760
  %v350 = vsub.f32 %v194, %v349
  %v351 = vand.u32 %v350, 4294901760
  %v352 = vsub.f32 %v350, %v351
  %v353 = vand.u32 %v352, 4294901760
  %354 = vmatpush1.msra.mxu0 %v353
  %v355 = vand.u32 %v193, 4294901760
  %v356 = vsub.f32 %v193, %v355
  %v357 = vand.u32 %v356, 4294901760
  %v358 = vsub.f32 %v356, %v357
  %v359 = vand.u32 %v358, 4294901760
  %360 = vmatprep.subr.mxu0 %v359
  %v361 = vand.u32 %v192, 4294901760
  %v362 = vsub.f32 %v192, %v361
  %v363 = vand.u32 %v362, 4294901760
  %v364 = vsub.f32 %v362, %v363
  %v365 = vand.u32 %v364, 4294901760
  %366 = vmatpush1.msra.mxu0 %v365
  %367 = vmatprep.subr.mxu0 0.0
  %368 = vmatpush2.msra.mxu0 0.0
  %369 = vmatprep.subr.mxu0 0.0
  %370 = vmatpush2.msra.mxu0 0.0
  %371 = vmatprep.subr.mxu0 0.0
  %372 = vmatpush2.msra.mxu0 0.0
  %373 = vmatprep.subr.mxu0 0.0
  %374 = vmatpush2.msra.mxu0 0.0
  %375 = vmatprep.subr.mxu0 0.0
  %376 = vmatpush2.msra.mxu0 0.0
  %377 = vmatprep.subr.mxu0 0.0
  %378 = vmatpush2.msra.mxu0 0.0
  %379 = vmatprep.subr.mxu0 0.0
  %380 = vmatpush2.msra.mxu0 0.0
  %381 = vmatprep.subr.mxu0 0.0
  %382 = vmatpush2.msra.mxu0 0.0
  %383 = vmatprep.subr.mxu0 0.0
  %384 = vmatpush2.msra.mxu0 0.0
  %385 = vmatprep.subr.mxu0 0.0
  %386 = vmatpush2.msra.mxu0 0.0
  %387 = vmatprep.subr.mxu0 0.0
  %388 = vmatpush2.msra.mxu0 0.0
  %389 = vmatprep.subr.mxu0 0.0
  %390 = vmatpush2.msra.mxu0 0.0
  %391 = vmatprep.subr.mxu0 0.0
  %392 = vmatpush2.msra.mxu0 0.0
  %393 = vmatprep.subr.mxu0 0.0
  %394 = vmatpush2.msra.mxu0 0.0
  %395 = vmatprep.subr.mxu0 0.0
  %396 = vmatpush2.msra.mxu0 0.0
  %397 = vmatprep.subr.mxu0 0.0
  %398 = vmatpush2.msra.mxu0 0.0
  %399 = vmatprep.mubr.f32.mxu0 0.0
  %v400 = vand.u32 %v202, 4294901760
  %401 = vmatmul.mubr.f32.gmra.mxu0 %v400
  %v402 = vpop.f32.mrf.mxu0
  %v403 = vadd.f32 %v291, %v402
  %v404 = vpop.f32.mrf.mxu0
  %v405 = vadd.f32 %v293, %v404
  %406 = vdwg.mxu0
  %407 = vmatprep.subr.mxu0 0.0
  %408 = vmatpush1.msra.mxu0 0.0
  %409 = vmatprep.subr.mxu0 0.0
  %410 = vmatpush1.msra.mxu0 0.0
  %411 = vmatprep.subr.mxu0 0.0
  %412 = vmatpush1.msra.mxu0 0.0
  %413 = vmatprep.subr.mxu0 0.0
  %414 = vmatpush1.msra.mxu0 0.0
  %415 = vmatprep.subr.mxu0 0.0
  %416 = vmatpush1.msra.mxu0 0.0
  %417 = vmatprep.subr.mxu0 0.0
  %418 = vmatpush1.msra.mxu0 0.0
  %419 = vmatprep.subr.mxu0 0.0
  %420 = vmatpush1.msra.mxu0 0.0
  %421 = vmatprep.subr.mxu0 0.0
  %422 = vmatpush1.msra.mxu0 0.0
  %423 = vmatprep.subr.mxu0 0.0
  %424 = vmatpush1.msra.mxu0 0.0
  %425 = vmatprep.subr.mxu0 0.0
  %426 = vmatpush1.msra.mxu0 0.0
  %427 = vmatprep.subr.mxu0 0.0
  %428 = vmatpush1.msra.mxu0 0.0
  %429 = vmatprep.subr.mxu0 0.0
  %430 = vmatpush1.msra.mxu0 0.0
  %v431 = vand.u32 %v209, 4294901760
  %v432 = vsub.f32 %v209, %v431
  %433 = vmatprep.subr.mxu0 %v432
  %v434 = vand.u32 %v206, 4294901760
  %v435 = vsub.f32 %v206, %v434
  %436 = vmatpush1.msra.mxu0 %v435
  %v437 = vand.u32 %v197, 4294901760
  %v438 = vsub.f32 %v197, %v437
  %439 = vmatprep.subr.mxu0 %v438
  %v440 = vand.u32 %v196, 4294901760
  %v441 = vsub.f32 %v196, %v440
  %442 = vmatpush1.msra.mxu0 %v441
  %v443 = vand.u32 %v195, 4294901760
  %v444 = vsub.f32 %v195, %v443
  %445 = vmatprep.subr.mxu0 %v444
  %v446 = vand.u32 %v194, 4294901760
  %v447 = vsub.f32 %v194, %v446
  %448 = vmatpush1.msra.mxu0 %v447
  %v449 = vand.u32 %v193, 4294901760
  %v450 = vsub.f32 %v193, %v449
  %451 = vmatprep.subr.mxu0 %v450
  %v452 = vand.u32 %v192, 4294901760
  %v453 = vsub.f32 %v192, %v452
  %454 = vmatpush1.msra.mxu0 %v453
  %455 = vmatprep.subr.mxu0 0.0
  %456 = vmatpush2.msra.mxu0 0.0
  %457 = vmatprep.subr.mxu0 0.0
  %458 = vmatpush2.msra.mxu0 0.0
  %459 = vmatprep.subr.mxu0 0.0
  %460 = vmatpush2.msra.mxu0 0.0
  %461 = vmatprep.subr.mxu0 0.0
  %462 = vmatpush2.msra.mxu0 0.0
  %463 = vmatprep.subr.mxu0 0.0
  %464 = vmatpush2.msra.mxu0 0.0
  %465 = vmatprep.subr.mxu0 0.0
  %466 = vmatpush2.msra.mxu0 0.0
  %467 = vmatprep.subr.mxu0 0.0
  %468 = vmatpush2.msra.mxu0 0.0
  %469 = vmatprep.subr.mxu0 0.0
  %470 = vmatpush2.msra.mxu0 0.0
  %471 = vmatprep.subr.mxu0 0.0
  %472 = vmatpush2.msra.mxu0 0.0
  %473 = vmatprep.subr.mxu0 0.0
  %474 = vmatpush2.msra.mxu0 0.0
  %475 = vmatprep.subr.mxu0 0.0
  %476 = vmatpush2.msra.mxu0 0.0
  %477 = vmatprep.subr.mxu0 0.0
  %478 = vmatpush2.msra.mxu0 0.0
  %479 = vmatprep.subr.mxu0 0.0
  %480 = vmatpush2.msra.mxu0 0.0
  %481 = vmatprep.subr.mxu0 0.0
  %482 = vmatpush2.msra.mxu0 0.0
  %483 = vmatprep.subr.mxu0 0.0
  %484 = vmatpush2.msra.mxu0 0.0
  %485 = vmatprep.subr.mxu0 0.0
  %486 = vmatpush2.msra.mxu0 0.0
  %487 = vmatprep.mubr.f32.mxu0 0.0
  %v488 = vand.u32 %v202, 4294901760
  %v489 = vsub.f32 %v202, %v488
  %490 = vmatmul.mubr.f32.gmra.mxu0 %v489
  %v491 = vpop.f32.mrf.mxu0
  %v492 = vadd.f32 %v403, %v491
  %v493 = vpop.f32.mrf.mxu0
  %v494 = vadd.f32 %v405, %v493
  %495 = vdwg.mxu0
  %496 = vmatprep.subr.mxu0 0.0
  %497 = vmatpush1.msra.mxu0 0.0
  %498 = vmatprep.subr.mxu0 0.0
  %499 = vmatpush1.msra.mxu0 0.0
  %500 = vmatprep.subr.mxu0 0.0
  %501 = vmatpush1.msra.mxu0 0.0
  %502 = vmatprep.subr.mxu0 0.0
  %503 = vmatpush1.msra.mxu0 0.0
  %504 = vmatprep.subr.mxu0 0.0
  %505 = vmatpush1.msra.mxu0 0.0
  %506 = vmatprep.subr.mxu0 0.0
  %507 = vmatpush1.msra.mxu0 0.0
  %508 = vmatprep.subr.mxu0 0.0
  %509 = vmatpush1.msra.mxu0 0.0
  %510 = vmatprep.subr.mxu0 0.0
  %511 = vmatpush1.msra.mxu0 0.0
  %512 = vmatprep.subr.mxu0 0.0
  %513 = vmatpush1.msra.mxu0 0.0
  %514 = vmatprep.subr.mxu0 0.0
  %515 = vmatpush1.msra.mxu0 0.0
  %516 = vmatprep.subr.mxu0 0.0
  %517 = vmatpush1.msra.mxu0 0.0
  %518 = vmatprep.subr.mxu0 0.0
  %519 = vmatpush1.msra.mxu0 0.0
  %v520 = vand.u32 %v209, 4294901760
  %521 = vmatprep.subr.mxu0 %v520
  %v522 = vand.u32 %v206, 4294901760
  %523 = vmatpush1.msra.mxu0 %v522
  %v524 = vand.u32 %v197, 4294901760
  %525 = vmatprep.subr.mxu0 %v524
  %v526 = vand.u32 %v196, 4294901760
  %527 = vmatpush1.msra.mxu0 %v526
  %v528 = vand.u32 %v195, 4294901760
  %529 = vmatprep.subr.mxu0 %v528
  %v530 = vand.u32 %v194, 4294901760
  %531 = vmatpush1.msra.mxu0 %v530
  %v532 = vand.u32 %v193, 4294901760
  %533 = vmatprep.subr.mxu0 %v532
  %v534 = vand.u32 %v192, 4294901760
  %535 = vmatpush1.msra.mxu0 %v534
  %536 = vmatprep.subr.mxu0 0.0
  %537 = vmatpush2.msra.mxu0 0.0
  %538 = vmatprep.subr.mxu0 0.0
  %539 = vmatpush2.msra.mxu0 0.0
  %540 = vmatprep.subr.mxu0 0.0
  %541 = vmatpush2.msra.mxu0 0.0
  %542 = vmatprep.subr.mxu0 0.0
  %543 = vmatpush2.msra.mxu0 0.0
  %544 = vmatprep.subr.mxu0 0.0
  %545 = vmatpush2.msra.mxu0 0.0
  %546 = vmatprep.subr.mxu0 0.0
  %547 = vmatpush2.msra.mxu0 0.0
  %548 = vmatprep.subr.mxu0 0.0
  %549 = vmatpush2.msra.mxu0 0.0
  %550 = vmatprep.subr.mxu0 0.0
  %551 = vmatpush2.msra.mxu0 0.0
  %552 = vmatprep.subr.mxu0 0.0
  %553 = vmatpush2.msra.mxu0 0.0
  %554 = vmatprep.subr.mxu0 0.0
  %555 = vmatpush2.msra.mxu0 0.0
  %556 = vmatprep.subr.mxu0 0.0
  %557 = vmatpush2.msra.mxu0 0.0
  %558 = vmatprep.subr.mxu0 0.0
  %559 = vmatpush2.msra.mxu0 0.0
  %560 = vmatprep.subr.mxu0 0.0
  %561 = vmatpush2.msra.mxu0 0.0
  %562 = vmatprep.subr.mxu0 0.0
  %563 = vmatpush2.msra.mxu0 0.0
  %564 = vmatprep.subr.mxu0 0.0
  %565 = vmatpush2.msra.mxu0 0.0
  %566 = vmatprep.subr.mxu0 0.0
  %567 = vmatpush2.msra.mxu0 0.0
  %568 = vmatprep.mubr.f32.mxu0 0.0
  %v569 = vand.u32 %v202, 4294901760
  %v570 = vsub.f32 %v202, %v569
  %v571 = vand.u32 %v570, 4294901760
  %572 = vmatmul.mubr.f32.gmra.mxu0 %v571
  %v573 = vpop.f32.mrf.mxu0
  %v574 = vadd.f32 %v492, %v573
  %v575 = vpop.f32.mrf.mxu0
  %v576 = vadd.f32 %v494, %v575
  %577 = vdwg.mxu0
  %578 = vmatprep.subr.mxu0 0.0
  %579 = vmatpush1.msra.mxu0 0.0
  %580 = vmatprep.subr.mxu0 0.0
  %581 = vmatpush1.msra.mxu0 0.0
  %582 = vmatprep.subr.mxu0 0.0
  %583 = vmatpush1.msra.mxu0 0.0
  %584 = vmatprep.subr.mxu0 0.0
  %585 = vmatpush1.msra.mxu0 0.0
  %586 = vmatprep.subr.mxu0 0.0
  %587 = vmatpush1.msra.mxu0 0.0
  %588 = vmatprep.subr.mxu0 0.0
  %589 = vmatpush1.msra.mxu0 0.0
  %590 = vmatprep.subr.mxu0 0.0
  %591 = vmatpush1.msra.mxu0 0.0
  %592 = vmatprep.subr.mxu0 0.0
  %593 = vmatpush1.msra.mxu0 0.0
  %594 = vmatprep.subr.mxu0 0.0
  %595 = vmatpush1.msra.mxu0 0.0
  %596 = vmatprep.subr.mxu0 0.0
  %597 = vmatpush1.msra.mxu0 0.0
  %598 = vmatprep.subr.mxu0 0.0
  %599 = vmatpush1.msra.mxu0 0.0
  %600 = vmatprep.subr.mxu0 0.0
  %601 = vmatpush1.msra.mxu0 0.0
  %v602 = vand.u32 %v209, 4294901760
  %v603 = vsub.f32 %v209, %v602
  %v604 = vand.u32 %v603, 4294901760
  %605 = vmatprep.subr.mxu0 %v604
  %v606 = vand.u32 %v206, 4294901760
  %v607 = vsub.f32 %v206, %v606
  %v608 = vand.u32 %v607, 4294901760
  %609 = vmatpush1.msra.mxu0 %v608
  %v610 = vand.u32 %v197, 4294901760
  %v611 = vsub.f32 %v197, %v610
  %v612 = vand.u32 %v611, 4294901760
  %613 = vmatprep.subr.mxu0 %v612
  %v614 = vand.u32 %v196, 4294901760
  %v615 = vsub.f32 %v196, %v614
  %v616 = vand.u32 %v615, 4294901760
  %617 = vmatpush1.msra.mxu0 %v616
  %v618 = vand.u32 %v195, 4294901760
  %v619 = vsub.f32 %v195, %v618
  %v620 = vand.u32 %v619, 4294901760
  %621 = vmatprep.subr.mxu0 %v620
  %v622 = vand.u32 %v194, 4294901760
  %v623 = vsub.f32 %v194, %v622
  %v624 = vand.u32 %v623, 4294901760
  %625 = vmatpush1.msra.mxu0 %v624
  %v626 = vand.u32 %v193, 4294901760
  %v627 = vsub.f32 %v193, %v626
  %v628 = vand.u32 %v627, 4294901760
  %629 = vmatprep.subr.mxu0 %v628
  %v630 = vand.u32 %v192, 4294901760
  %v631 = vsub.f32 %v192, %v630
  %v632 = vand.u32 %v631, 4294901760
  %633 = vmatpush1.msra.mxu0 %v632
  %634 = vmatprep.subr.mxu0 0.0
  %635 = vmatpush2.msra.mxu0 0.0
  %636 = vmatprep.subr.mxu0 0.0
  %637 = vmatpush2.msra.mxu0 0.0
  %638 = vmatprep.subr.mxu0 0.0
  %639 = vmatpush2.msra.mxu0 0.0
  %640 = vmatprep.subr.mxu0 0.0
  %641 = vmatpush2.msra.mxu0 0.0
  %642 = vmatprep.subr.mxu0 0.0
  %643 = vmatpush2.msra.mxu0 0.0
  %644 = vmatprep.subr.mxu0 0.0
  %645 = vmatpush2.msra.mxu0 0.0
  %646 = vmatprep.subr.mxu0 0.0
  %647 = vmatpush2.msra.mxu0 0.0
  %648 = vmatprep.subr.mxu0 0.0
  %649 = vmatpush2.msra.mxu0 0.0
  %650 = vmatprep.subr.mxu0 0.0
  %651 = vmatpush2.msra.mxu0 0.0
  %652 = vmatprep.subr.mxu0 0.0
  %653 = vmatpush2.msra.mxu0 0.0
  %654 = vmatprep.subr.mxu0 0.0
  %655 = vmatpush2.msra.mxu0 0.0
  %656 = vmatprep.subr.mxu0 0.0
  %657 = vmatpush2.msra.mxu0 0.0
  %658 = vmatprep.subr.mxu0 0.0
  %659 = vmatpush2.msra.mxu0 0.0
  %660 = vmatprep.subr.mxu0 0.0
  %661 = vmatpush2.msra.mxu0 0.0
  %662 = vmatprep.subr.mxu0 0.0
  %663 = vmatpush2.msra.mxu0 0.0
  %664 = vmatprep.subr.mxu0 0.0
  %665 = vmatpush2.msra.mxu0 0.0
  %666 = vmatprep.mubr.f32.mxu0 0.0
  %v667 = vand.u32 %v202, 4294901760
  %668 = vmatmul.mubr.f32.gmra.mxu0 %v667
  %v669 = vpop.f32.mrf.mxu0
  %v670 = vadd.f32 %v574, %v669
  %v671 = vpop.f32.mrf.mxu0
  %v672 = vadd.f32 %v576, %v671
  %673 = vdwg.mxu0
  %674 = vmatprep.subr.mxu0 0.0
  %675 = vmatpush1.msra.mxu0 0.0
  %676 = vmatprep.subr.mxu0 0.0
  %677 = vmatpush1.msra.mxu0 0.0
  %678 = vmatprep.subr.mxu0 0.0
  %679 = vmatpush1.msra.mxu0 0.0
  %680 = vmatprep.subr.mxu0 0.0
  %681 = vmatpush1.msra.mxu0 0.0
  %682 = vmatprep.subr.mxu0 0.0
  %683 = vmatpush1.msra.mxu0 0.0
  %684 = vmatprep.subr.mxu0 0.0
  %685 = vmatpush1.msra.mxu0 0.0
  %686 = vmatprep.subr.mxu0 0.0
  %687 = vmatpush1.msra.mxu0 0.0
  %688 = vmatprep.subr.mxu0 0.0
  %689 = vmatpush1.msra.mxu0 0.0
  %690 = vmatprep.subr.mxu0 0.0
  %691 = vmatpush1.msra.mxu0 0.0
  %692 = vmatprep.subr.mxu0 0.0
  %693 = vmatpush1.msra.mxu0 0.0
  %694 = vmatprep.subr.mxu0 0.0
  %695 = vmatpush1.msra.mxu0 0.0
  %696 = vmatprep.subr.mxu0 0.0
  %697 = vmatpush1.msra.mxu0 0.0
  %v698 = vand.u32 %v209, 4294901760
  %699 = vmatprep.subr.mxu0 %v698
  %v700 = vand.u32 %v206, 4294901760
  %701 = vmatpush1.msra.mxu0 %v700
  %v702 = vand.u32 %v197, 4294901760
  %703 = vmatprep.subr.mxu0 %v702
  %v704 = vand.u32 %v196, 4294901760
  %705 = vmatpush1.msra.mxu0 %v704
  %v706 = vand.u32 %v195, 4294901760
  %707 = vmatprep.subr.mxu0 %v706
  %v708 = vand.u32 %v194, 4294901760
  %709 = vmatpush1.msra.mxu0 %v708
  %v710 = vand.u32 %v193, 4294901760
  %711 = vmatprep.subr.mxu0 %v710
  %v712 = vand.u32 %v192, 4294901760
  %713 = vmatpush1.msra.mxu0 %v712
  %714 = vmatprep.subr.mxu0 0.0
  %715 = vmatpush2.msra.mxu0 0.0
  %716 = vmatprep.subr.mxu0 0.0
  %717 = vmatpush2.msra.mxu0 0.0
  %718 = vmatprep.subr.mxu0 0.0
  %719 = vmatpush2.msra.mxu0 0.0
  %720 = vmatprep.subr.mxu0 0.0
  %721 = vmatpush2.msra.mxu0 0.0
  %722 = vmatprep.subr.mxu0 0.0
  %723 = vmatpush2.msra.mxu0 0.0
  %724 = vmatprep.subr.mxu0 0.0
  %725 = vmatpush2.msra.mxu0 0.0
  %726 = vmatprep.subr.mxu0 0.0
  %727 = vmatpush2.msra.mxu0 0.0
  %728 = vmatprep.subr.mxu0 0.0
  %729 = vmatpush2.msra.mxu0 0.0
  %730 = vmatprep.subr.mxu0 0.0
  %731 = vmatpush2.msra.mxu0 0.0
  %732 = vmatprep.subr.mxu0 0.0
  %733 = vmatpush2.msra.mxu0 0.0
  %734 = vmatprep.subr.mxu0 0.0
  %735 = vmatpush2.msra.mxu0 0.0
  %736 = vmatprep.subr.mxu0 0.0
  %737 = vmatpush2.msra.mxu0 0.0
  %738 = vmatprep.subr.mxu0 0.0
  %739 = vmatpush2.msra.mxu0 0.0
  %740 = vmatprep.subr.mxu0 0.0
  %741 = vmatpush2.msra.mxu0 0.0
  %742 = vmatprep.subr.mxu0 0.0
  %743 = vmatpush2.msra.mxu0 0.0
  %744 = vmatprep.subr.mxu0 0.0
  %745 = vmatpush2.msra.mxu0 0.0
  %746 = vmatprep.mubr.f32.mxu0 0.0
  %v747 = vand.u32 %v202, 4294901760
  %748 = vmatmul.mubr.f32.gmra.mxu0 %v747
  %v749 = vpop.f32.mrf.mxu0
  %v750 = vadd.f32 %v670, %v749
  %v751 = vpop.f32.mrf.mxu0
  %v752 = vadd.f32 %v672, %v751
  %753 = vdwg.mxu0
  %754 = vst [vmem:[%s2] sm:$0x3f] %v750
  %755 = vst [vmem:[%s2 + $0x8] sm:$0x3f] %v752
  %s756 = scalar_lea.vmem %s1, 12
  %v757 = vld [vmem:[%s756] sm:$0x77]
  %v759 = vcombine.high %v757, %v757
  %761 = vst [vmem:[#allocation2] sm:$0x7] %v757
  %762 = vst [vmem:[#allocation2 + $0x8] sm:$0x7] %v759
  %v763 = vld [vmem:[%s756] sm:$0x77]
  %v764 = vld [vmem:[%s756 + $0x8] sm:$0x7]
  %v767 = vcombine.high %v763, %v763
  %v768 = vrot.slane %v763, 5
  %v769 = vrot.slane %v767, 5
  %v770 = vrot.slane %v764, 5
  %771 = vrot.lane.b32.xlu0 %v768, 127
  %v772 = vpop.permute.xlu0 %771
  %773 = vrot.lane.b32.xlu0 %v769, 127
  %v774 = vpop.permute.xlu0 %773
  %775 = vrot.lane.b32.xlu0 %v770, 127
  %v776 = vpop.permute.xlu0 %775
  %v777 = vsel %vm38, %v772, %v774
  %v778 = vsel %vm38, %v774, %v776
  %781 = vst [vmem:[#allocation2] sm:$0x38] %v777
  %782 = vst [vmem:[#allocation2 + $0x8] sm:$0x38] %v778
  %v783 = vld [vmem:[%s756] sm:$0x77]
  %v784 = vld [vmem:[%s756 + $0x8] sm:$0x7]
  %v787 = vcombine.high %v783, %v783
  %v788 = vrot.slane %v783, 2
  %v789 = vrot.slane %v787, 2
  %v790 = vrot.slane %v784, 2
  %791 = vrot.lane.b32.xlu0 %v788, 126
  %v792 = vpop.permute.xlu0 %791
  %793 = vrot.lane.b32.xlu0 %v789, 126
  %v794 = vpop.permute.xlu0 %793
  %795 = vrot.lane.b32.xlu0 %v790, 126
  %v796 = vpop.permute.xlu0 %795
  %v797 = vsel %vm59, %v792, %v794
  %v798 = vsel %vm59, %v794, %v796
  %801 = vst [vmem:[#allocation2] sm:$0xc0] %v797
  %802 = vst [vmem:[#allocation2 + $0x8] sm:$0xc0] %v798
  %803 = vst [vmem:[#allocation2 + $0x10] sm:$0x1] %v797
  %804 = vst [vmem:[#allocation2 + $0x18] sm:$0x1] %v798
  %v805 = vld [vmem:[%s756] sm:$0x77]
  %v806 = vld [vmem:[%s756 + $0x8] sm:$0x7]
  %v809 = vcombine.high %v805, %v805
  %v810 = vrot.slane %v805, 7
  %v811 = vrot.slane %v809, 7
  %v812 = vrot.slane %v806, 7
  %813 = vrot.lane.b32.xlu0 %v810, 112
  %v814 = vpop.permute.xlu0 %813
  %815 = vrot.lane.b32.xlu0 %v811, 112
  %v816 = vpop.permute.xlu0 %815
  %817 = vrot.lane.b32.xlu0 %v812, 112
  %v818 = vpop.permute.xlu0 %817
  %v819 = vsel %vm82, %v814, %v816
  %v820 = vsel %vm82, %v816, %v818
  %823 = vst [vmem:[#allocation2 + $0x10] sm:$0xe] %v819
  %824 = vst [vmem:[#allocation2 + $0x18] sm:$0xe] %v820
  %v825 = vld [vmem:[%s756] sm:$0x77]
  %v826 = vld [vmem:[%s756 + $0x8] sm:$0x7]
  %v829 = vcombine.low %v825, %v825
  %v830 = vcombine.low %v826, %v826
  %831 = vrot.lane.b32.xlu0 %v829, 111
  %v832 = vpop.permute.xlu0 %831
  %833 = vrot.lane.b32.xlu0 %v825, 111
  %v834 = vpop.permute.xlu0 %833
  %835 = vrot.lane.b32.xlu0 %v830, 111
  %v836 = vpop.permute.xlu0 %835
  %v837 = vsel %vm101, %v832, %v834
  %v838 = vsel %vm101, %v834, %v836
  %841 = vst [vmem:[#allocation2 + $0x10] sm:$0x70] %v837
  %842 = vst [vmem:[#allocation2 + $0x18] sm:$0x70] %v838
  %v843 = vld [vmem:[%s756] sm:$0x77]
  %v844 = vld [vmem:[%s756 + $0x8] sm:$0x7]
  %v847 = vcombine.high %v843, %v843
  %v848 = vrot.slane %v843, 1
  %v849 = vrot.slane %v847, 1
  %v850 = vrot.slane %v844, 1
  %851 = vrot.lane.b32.xlu0 %v848, 110
  %v852 = vpop.permute.xlu0 %851
  %853 = vrot.lane.b32.xlu0 %v849, 110
  %v854 = vpop.permute.xlu0 %853
  %855 = vrot.lane.b32.xlu0 %v850, 110
  %v856 = vpop.permute.xlu0 %855
  %v857 = vsel %vm122, %v852, %v854
  %v858 = vsel %vm122, %v854, %v856
  %861 = vst [vmem:[#allocation2 + $0x10] sm:$0x80] %v857
  %862 = vst [vmem:[#allocation2 + $0x18] sm:$0x80] %v858
  %863 = vst [vmem:[#allocation2 + $0x20] sm:$0x3] %v857
  %864 = vst [vmem:[#allocation2 + $0x28] sm:$0x3] %v858
  %v865 = vld [vmem:[%s756] sm:$0x77]
  %v866 = vld [vmem:[%s756 + $0x8] sm:$0x7]
  %v869 = vcombine.high %v865, %v865
  %v870 = vrot.slane %v865, 6
  %v871 = vrot.slane %v869, 6
  %v872 = vrot.slane %v866, 6
  %873 = vrot.lane.b32.xlu0 %v870, 96
  %v874 = vpop.permute.xlu0 %873
  %875 = vrot.lane.b32.xlu0 %v871, 96
  %v876 = vpop.permute.xlu0 %875
  %877 = vrot.lane.b32.xlu0 %v872, 96
  %v878 = vpop.permute.xlu0 %877
  %v879 = vsel %vm145, %v874, %v876
  %v880 = vsel %vm145, %v876, %v878
  %883 = vst [vmem:[#allocation2 + $0x20] sm:$0x1c] %v879
  %884 = vst [vmem:[#allocation2 + $0x28] sm:$0x1c] %v880
  %v885 = vld [vmem:[%s756] sm:$0x77]
  %v886 = vld [vmem:[%s756 + $0x8] sm:$0x7]
  %v889 = vcombine.high %v885, %v885
  %v890 = vrot.slane %v885, 3
  %v891 = vrot.slane %v889, 3
  %v892 = vrot.slane %v886, 3
  %893 = vrot.lane.b32.xlu0 %v890, 95
  %v894 = vpop.permute.xlu0 %893
  %895 = vrot.lane.b32.xlu0 %v891, 95
  %v896 = vpop.permute.xlu0 %895
  %897 = vrot.lane.b32.xlu0 %v892, 95
  %v898 = vpop.permute.xlu0 %897
  %v899 = vsel %vm166, %v894, %v896
  %v900 = vsel %vm166, %v896, %v898
  %903 = vst [vmem:[#allocation2 + $0x20] sm:$0xe0] %v899
  %904 = vst [vmem:[#allocation2 + $0x28] sm:$0xe0] %v900
  %v905 = vld [vmem:[%s756] sm:$0x77]
  %v906 = vld [vmem:[%s756 + $0x8] sm:$0x7]
  %v909 = vcombine.high %v905, %v905
  %910 = vrot.lane.b32.xlu0 %v905, 94
  %v911 = vpop.permute.xlu0 %910
  %912 = vrot.lane.b32.xlu0 %v909, 94
  %v913 = vpop.permute.xlu0 %912
  %914 = vrot.lane.b32.xlu0 %v906, 94
  %v915 = vpop.permute.xlu0 %914
  %v916 = vsel %vm184, %v911, %v913
  %v917 = vsel %vm184, %v913, %v915
  %920 = vst [vmem:[#allocation2 + $0x30] sm:$0x7] %v916
  %921 = vst [vmem:[#allocation2 + $0x38] sm:$0x7] %v917
  %v922 = vld [vmem:[%s0] sm:$0x3f]
  %v923 = vld [vmem:[#allocation2] sm:$0xff]
  %v924 = vld [vmem:[#allocation2 + $0x8] sm:$0xff]
  %v925 = vld [vmem:[#allocation2 + $0x10] sm:$0xff]
  %v926 = vld [vmem:[#allocation2 + $0x18] sm:$0xff]
  %v927 = vld [vmem:[#allocation2 + $0x20] sm:$0xff]
  %v928 = vld [vmem:[#allocation2 + $0x28] sm:$0xff]
  %v929 = vld [vmem:[#allocation2 + $0x30] sm:$0xf]
  %v930 = vld [vmem:[#allocation2 + $0x38] sm:$0xf]
  %v932 = vsel %vm200, %v922, 0
  %v935 = vsel %vm204, %v929, 0
  %v938 = vsel %vm204, %v930, 0
  %940 = vmatprep.subr.mxu0 0.0
  %941 = vmatpush1.msra.mxu0 0.0
  %942 = vmatprep.subr.mxu0 0.0
  %943 = vmatpush1.msra.mxu0 0.0
  %944 = vmatprep.subr.mxu0 0.0
  %945 = vmatpush1.msra.mxu0 0.0
  %946 = vmatprep.subr.mxu0 0.0
  %947 = vmatpush1.msra.mxu0 0.0
  %948 = vmatprep.subr.mxu0 0.0
  %949 = vmatpush1.msra.mxu0 0.0
  %950 = vmatprep.subr.mxu0 0.0
  %951 = vmatpush1.msra.mxu0 0.0
  %952 = vmatprep.subr.mxu0 0.0
  %953 = vmatpush1.msra.mxu0 0.0
  %954 = vmatprep.subr.mxu0 0.0
  %955 = vmatpush1.msra.mxu0 0.0
  %956 = vmatprep.subr.mxu0 0.0
  %957 = vmatpush1.msra.mxu0 0.0
  %958 = vmatprep.subr.mxu0 0.0
  %959 = vmatpush1.msra.mxu0 0.0
  %960 = vmatprep.subr.mxu0 0.0
  %961 = vmatpush1.msra.mxu0 0.0
  %962 = vmatprep.subr.mxu0 0.0
  %963 = vmatpush1.msra.mxu0 0.0
  %v964 = vand.u32 %v938, 4294901760
  %965 = vmatprep.subr.mxu0 %v964
  %v966 = vand.u32 %v935, 4294901760
  %967 = vmatpush1.msra.mxu0 %v966
  %v968 = vand.u32 %v928, 4294901760
  %969 = vmatprep.subr.mxu0 %v968
  %v970 = vand.u32 %v927, 4294901760
  %971 = vmatpush1.msra.mxu0 %v970
  %v972 = vand.u32 %v926, 4294901760
  %973 = vmatprep.subr.mxu0 %v972
  %v974 = vand.u32 %v925, 4294901760
  %975 = vmatpush1.msra.mxu0 %v974
  %v976 = vand.u32 %v924, 4294901760
  %977 = vmatprep.subr.mxu0 %v976
  %v978 = vand.u32 %v923, 4294901760
  %979 = vmatpush1.msra.mxu0 %v978
  %980 = vmatprep.subr.mxu0 0.0
  %981 = vmatpush2.msra.mxu0 0.0
  %982 = vmatprep.subr.mxu0 0.0
  %983 = vmatpush2.msra.mxu0 0.0
  %984 = vmatprep.subr.mxu0 0.0
  %985 = vmatpush2.msra.mxu0 0.0
  %986 = vmatprep.subr.mxu0 0.0
  %987 = vmatpush2.msra.mxu0 0.0
  %988 = vmatprep.subr.mxu0 0.0
  %989 = vmatpush2.msra.mxu0 0.0
  %990 = vmatprep.subr.mxu0 0.0
  %991 = vmatpush2.msra.mxu0 0.0
  %992 = vmatprep.subr.mxu0 0.0
  %993 = vmatpush2.msra.mxu0 0.0
  %994 = vmatprep.subr.mxu0 0.0
  %995 = vmatpush2.msra.mxu0 0.0
  %996 = vmatprep.subr.mxu0 0.0
  %997 = vmatpush2.msra.mxu0 0.0
  %998 = vmatprep.subr.mxu0 0.0
  %999 = vmatpush2.msra.mxu0 0.0
  %1000 = vmatprep.subr.mxu0 0.0
  %1001 = vmatpush2.msra.mxu0 0.0
  %1002 = vmatprep.subr.mxu0 0.0
  %1003 = vmatpush2.msra.mxu0 0.0
  %1004 = vmatprep.subr.mxu0 0.0
  %1005 = vmatpush2.msra.mxu0 0.0
  %1006 = vmatprep.subr.mxu0 0.0
  %1007 = vmatpush2.msra.mxu0 0.0
  %1008 = vmatprep.subr.mxu0 0.0
  %1009 = vmatpush2.msra.mxu0 0.0
  %1010 = vmatprep.subr.mxu0 0.0
  %1011 = vmatpush2.msra.mxu0 0.0
  %1012 = vmatprep.mubr.f32.mxu0 0.0
  %v1013 = vand.u32 %v932, 4294901760
  %v1014 = vsub.f32 %v932, %v1013
  %v1015 = vand.u32 %v1014, 4294901760
  %v1016 = vsub.f32 %v1014, %v1015
  %v1017 = vand.u32 %v1016, 4294901760
  %1018 = vmatmul.mubr.f32.gmra.mxu0 %v1017
  %v1019 = vpop.f32.mrf.mxu0
  %v1020 = vadd.f32 0.0, %v1019
  %v1021 = vpop.f32.mrf.mxu0
  %v1022 = vadd.f32 0.0, %v1021
  %1023 = vdwg.mxu0
  %1024 = vmatprep.subr.mxu0 0.0
  %1025 = vmatpush1.msra.mxu0 0.0
  %1026 = vmatprep.subr.mxu0 0.0
  %1027 = vmatpush1.msra.mxu0 0.0
  %1028 = vmatprep.subr.mxu0 0.0
  %1029 = vmatpush1.msra.mxu0 0.0
  %1030 = vmatprep.subr.mxu0 0.0
  %1031 = vmatpush1.msra.mxu0 0.0
  %1032 = vmatprep.subr.mxu0 0.0
  %1033 = vmatpush1.msra.mxu0 0.0
  %1034 = vmatprep.subr.mxu0 0.0
  %1035 = vmatpush1.msra.mxu0 0.0
  %1036 = vmatprep.subr.mxu0 0.0
  %1037 = vmatpush1.msra.mxu0 0.0
  %1038 = vmatprep.subr.mxu0 0.0
  %1039 = vmatpush1.msra.mxu0 0.0
  %1040 = vmatprep.subr.mxu0 0.0
  %1041 = vmatpush1.msra.mxu0 0.0
  %1042 = vmatprep.subr.mxu0 0.0
  %1043 = vmatpush1.msra.mxu0 0.0
  %1044 = vmatprep.subr.mxu0 0.0
  %1045 = vmatpush1.msra.mxu0 0.0
  %1046 = vmatprep.subr.mxu0 0.0
  %1047 = vmatpush1.msra.mxu0 0.0
  %v1048 = vand.u32 %v938, 4294901760
  %v1049 = vsub.f32 %v938, %v1048
  %v1050 = vand.u32 %v1049, 4294901760
  %v1051 = vsub.f32 %v1049, %v1050
  %v1052 = vand.u32 %v1051, 4294901760
  %1053 = vmatprep.subr.mxu0 %v1052
  %v1054 = vand.u32 %v935, 4294901760
  %v1055 = vsub.f32 %v935, %v1054
  %v1056 = vand.u32 %v1055, 4294901760
  %v1057 = vsub.f32 %v1055, %v1056
  %v1058 = vand.u32 %v1057, 4294901760
  %1059 = vmatpush1.msra.mxu0 %v1058
  %v1060 = vand.u32 %v928, 4294901760
  %v1061 = vsub.f32 %v928, %v1060
  %v1062 = vand.u32 %v1061, 4294901760
  %v1063 = vsub.f32 %v1061, %v1062
  %v1064 = vand.u32 %v1063, 4294901760
  %1065 = vmatprep.subr.mxu0 %v1064
  %v1066 = vand.u32 %v927, 4294901760
  %v1067 = vsub.f32 %v927, %v1066
  %v1068 = vand.u32 %v1067, 4294901760
  %v1069 = vsub.f32 %v1067, %v1068
  %v1070 = vand.u32 %v1069, 4294901760
  %1071 = vmatpush1.msra.mxu0 %v1070
  %v1072 = vand.u32 %v926, 4294901760
  %v1073 = vsub.f32 %v926, %v1072
  %v1074 = vand.u32 %v1073, 4294901760
  %v1075 = vsub.f32 %v1073, %v1074
  %v1076 = vand.u32 %v1075, 4294901760
  %1077 = vmatprep.subr.mxu0 %v1076
  %v1078 = vand.u32 %v925, 4294901760
  %v1079 = vsub.f32 %v925, %v1078
  %v1080 = vand.u32 %v1079, 4294901760
  %v1081 = vsub.f32 %v1079, %v1080
  %v1082 = vand.u32 %v1081, 4294901760
  %1083 = vmatpush1.msra.mxu0 %v1082
  %v1084 = vand.u32 %v924, 4294901760
  %v1085 = vsub.f32 %v924, %v1084
  %v1086 = vand.u32 %v1085, 4294901760
  %v1087 = vsub.f32 %v1085, %v1086
  %v1088 = vand.u32 %v1087, 4294901760
  %1089 = vmatprep.subr.mxu0 %v1088
  %v1090 = vand.u32 %v923, 4294901760
  %v1091 = vsub.f32 %v923, %v1090
  %v1092 = vand.u32 %v1091, 4294901760
  %v1093 = vsub.f32 %v1091, %v1092
  %v1094 = vand.u32 %v1093, 4294901760
  %1095 = vmatpush1.msra.mxu0 %v1094
  %1096 = vmatprep.subr.mxu0 0.0
  %1097 = vmatpush2.msra.mxu0 0.0
  %1098 = vmatprep.subr.mxu0 0.0
  %1099 = vmatpush2.msra.mxu0 0.0
  %1100 = vmatprep.subr.mxu0 0.0
  %1101 = vmatpush2.msra.mxu0 0.0
  %1102 = vmatprep.subr.mxu0 0.0
  %1103 = vmatpush2.msra.mxu0 0.0
  %1104 = vmatprep.subr.mxu0 0.0
  %1105 = vmatpush2.msra.mxu0 0.0
  %1106 = vmatprep.subr.mxu0 0.0
  %1107 = vmatpush2.msra.mxu0 0.0
  %1108 = vmatprep.subr.mxu0 0.0
  %1109 = vmatpush2.msra.mxu0 0.0
  %1110 = vmatprep.subr.mxu0 0.0
  %1111 = vmatpush2.msra.mxu0 0.0
  %1112 = vmatprep.subr.mxu0 0.0
  %1113 = vmatpush2.msra.mxu0 0.0
  %1114 = vmatprep.subr.mxu0 0.0
  %1115 = vmatpush2.msra.mxu0 0.0
  %1116 = vmatprep.subr.mxu0 0.0
  %1117 = vmatpush2.msra.mxu0 0.0
  %1118 = vmatprep.subr.mxu0 0.0
  %1119 = vmatpush2.msra.mxu0 0.0
  %1120 = vmatprep.subr.mxu0 0.0
  %1121 = vmatpush2.msra.mxu0 0.0
  %1122 = vmatprep.subr.mxu0 0.0
  %1123 = vmatpush2.msra.mxu0 0.0
  %1124 = vmatprep.subr.mxu0 0.0
  %1125 = vmatpush2.msra.mxu0 0.0
  %1126 = vmatprep.subr.mxu0 0.0
  %1127 = vmatpush2.msra.mxu0 0.0
  %1128 = vmatprep.mubr.f32.mxu0 0.0
  %v1129 = vand.u32 %v932, 4294901760
  %1130 = vmatmul.mubr.f32.gmra.mxu0 %v1129
  %v1131 = vpop.f32.mrf.mxu0
  %v1132 = vadd.f32 %v1020, %v1131
  %v1133 = vpop.f32.mrf.mxu0
  %v1134 = vadd.f32 %v1022, %v1133
  %1135 = vdwg.mxu0
  %1136 = vmatprep.subr.mxu0 0.0
  %1137 = vmatpush1.msra.mxu0 0.0
  %1138 = vmatprep.subr.mxu0 0.0
  %1139 = vmatpush1.msra.mxu0 0.0
  %1140 = vmatprep.subr.mxu0 0.0
  %1141 = vmatpush1.msra.mxu0 0.0
  %1142 = vmatprep.subr.mxu0 0.0
  %1143 = vmatpush1.msra.mxu0 0.0
  %1144 = vmatprep.subr.mxu0 0.0
  %1145 = vmatpush1.msra.mxu0 0.0
  %1146 = vmatprep.subr.mxu0 0.0
  %1147 = vmatpush1.msra.mxu0 0.0
  %1148 = vmatprep.subr.mxu0 0.0
  %1149 = vmatpush1.msra.mxu0 0.0
  %1150 = vmatprep.subr.mxu0 0.0
  %1151 = vmatpush1.msra.mxu0 0.0
  %1152 = vmatprep.subr.mxu0 0.0
  %1153 = vmatpush1.msra.mxu0 0.0
  %1154 = vmatprep.subr.mxu0 0.0
  %1155 = vmatpush1.msra.mxu0 0.0
  %1156 = vmatprep.subr.mxu0 0.0
  %1157 = vmatpush1.msra.mxu0 0.0
  %1158 = vmatprep.subr.mxu0 0.0
  %1159 = vmatpush1.msra.mxu0 0.0
  %v1160 = vand.u32 %v938, 4294901760
  %v1161 = vsub.f32 %v938, %v1160
  %1162 = vmatprep.subr.mxu0 %v1161
  %v1163 = vand.u32 %v935, 4294901760
  %v1164 = vsub.f32 %v935, %v1163
  %1165 = vmatpush1.msra.mxu0 %v1164
  %v1166 = vand.u32 %v928, 4294901760
  %v1167 = vsub.f32 %v928, %v1166
  %1168 = vmatprep.subr.mxu0 %v1167
  %v1169 = vand.u32 %v927, 4294901760
  %v1170 = vsub.f32 %v927, %v1169
  %1171 = vmatpush1.msra.mxu0 %v1170
  %v1172 = vand.u32 %v926, 4294901760
  %v1173 = vsub.f32 %v926, %v1172
  %1174 = vmatprep.subr.mxu0 %v1173
  %v1175 = vand.u32 %v925, 4294901760
  %v1176 = vsub.f32 %v925, %v1175
  %1177 = vmatpush1.msra.mxu0 %v1176
  %v1178 = vand.u32 %v924, 4294901760
  %v1179 = vsub.f32 %v924, %v1178
  %1180 = vmatprep.subr.mxu0 %v1179
  %v1181 = vand.u32 %v923, 4294901760
  %v1182 = vsub.f32 %v923, %v1181
  %1183 = vmatpush1.msra.mxu0 %v1182
  %1184 = vmatprep.subr.mxu0 0.0
  %1185 = vmatpush2.msra.mxu0 0.0
  %1186 = vmatprep.subr.mxu0 0.0
  %1187 = vmatpush2.msra.mxu0 0.0
  %1188 = vmatprep.subr.mxu0 0.0
  %1189 = vmatpush2.msra.mxu0 0.0
  %1190 = vmatprep.subr.mxu0 0.0
  %1191 = vmatpush2.msra.mxu0 0.0
  %1192 = vmatprep.subr.mxu0 0.0
  %1193 = vmatpush2.msra.mxu0 0.0
  %1194 = vmatprep.subr.mxu0 0.0
  %1195 = vmatpush2.msra.mxu0 0.0
  %1196 = vmatprep.subr.mxu0 0.0
  %1197 = vmatpush2.msra.mxu0 0.0
  %1198 = vmatprep.subr.mxu0 0.0
  %1199 = vmatpush2.msra.mxu0 0.0
  %1200 = vmatprep.subr.mxu0 0.0
  %1201 = vmatpush2.msra.mxu0 0.0
  %1202 = vmatprep.subr.mxu0 0.0
  %1203 = vmatpush2.msra.mxu0 0.0
  %1204 = vmatprep.subr.mxu0 0.0
  %1205 = vmatpush2.msra.mxu0 0.0
  %1206 = vmatprep.subr.mxu0 0.0
  %1207 = vmatpush2.msra.mxu0 0.0
  %1208 = vmatprep.subr.mxu0 0.0
  %1209 = vmatpush2.msra.mxu0 0.0
  %1210 = vmatprep.subr.mxu0 0.0
  %1211 = vmatpush2.msra.mxu0 0.0
  %1212 = vmatprep.subr.mxu0 0.0
  %1213 = vmatpush2.msra.mxu0 0.0
  %1214 = vmatprep.subr.mxu0 0.0
  %1215 = vmatpush2.msra.mxu0 0.0
  %1216 = vmatprep.mubr.f32.mxu0 0.0
  %v1217 = vand.u32 %v932, 4294901760
  %v1218 = vsub.f32 %v932, %v1217
  %1219 = vmatmul.mubr.f32.gmra.mxu0 %v1218
  %v1220 = vpop.f32.mrf.mxu0
  %v1221 = vadd.f32 %v1132, %v1220
  %v1222 = vpop.f32.mrf.mxu0
  %v1223 = vadd.f32 %v1134, %v1222
  %1224 = vdwg.mxu0
  %1225 = vmatprep.subr.mxu0 0.0
  %1226 = vmatpush1.msra.mxu0 0.0
  %1227 = vmatprep.subr.mxu0 0.0
  %1228 = vmatpush1.msra.mxu0 0.0
  %1229 = vmatprep.subr.mxu0 0.0
  %1230 = vmatpush1.msra.mxu0 0.0
  %1231 = vmatprep.subr.mxu0 0.0
  %1232 = vmatpush1.msra.mxu0 0.0
  %1233 = vmatprep.subr.mxu0 0.0
  %1234 = vmatpush1.msra.mxu0 0.0
  %1235 = vmatprep.subr.mxu0 0.0
  %1236 = vmatpush1.msra.mxu0 0.0
  %1237 = vmatprep.subr.mxu0 0.0
  %1238 = vmatpush1.msra.mxu0 0.0
  %1239 = vmatprep.subr.mxu0 0.0
  %1240 = vmatpush1.msra.mxu0 0.0
  %1241 = vmatprep.subr.mxu0 0.0
  %1242 = vmatpush1.msra.mxu0 0.0
  %1243 = vmatprep.subr.mxu0 0.0
  %1244 = vmatpush1.msra.mxu0 0.0
  %1245 = vmatprep.subr.mxu0 0.0
  %1246 = vmatpush1.msra.mxu0 0.0
  %1247 = vmatprep.subr.mxu0 0.0
  %1248 = vmatpush1.msra.mxu0 0.0
  %v1249 = vand.u32 %v938, 4294901760
  %1250 = vmatprep.subr.mxu0 %v1249
  %v1251 = vand.u32 %v935, 4294901760
  %1252 = vmatpush1.msra.mxu0 %v1251
  %v1253 = vand.u32 %v928, 4294901760
  %1254 = vmatprep.subr.mxu0 %v1253
  %v1255 = vand.u32 %v927, 4294901760
  %1256 = vmatpush1.msra.mxu0 %v1255
  %v1257 = vand.u32 %v926, 4294901760
  %1258 = vmatprep.subr.mxu0 %v1257
  %v1259 = vand.u32 %v925, 4294901760
  %1260 = vmatpush1.msra.mxu0 %v1259
  %v1261 = vand.u32 %v924, 4294901760
  %1262 = vmatprep.subr.mxu0 %v1261
  %v1263 = vand.u32 %v923, 4294901760
  %1264 = vmatpush1.msra.mxu0 %v1263
  %1265 = vmatprep.subr.mxu0 0.0
  %1266 = vmatpush2.msra.mxu0 0.0
  %1267 = vmatprep.subr.mxu0 0.0
  %1268 = vmatpush2.msra.mxu0 0.0
  %1269 = vmatprep.subr.mxu0 0.0
  %1270 = vmatpush2.msra.mxu0 0.0
  %1271 = vmatprep.subr.mxu0 0.0
  %1272 = vmatpush2.msra.mxu0 0.0
  %1273 = vmatprep.subr.mxu0 0.0
  %1274 = vmatpush2.msra.mxu0 0.0
  %1275 = vmatprep.subr.mxu0 0.0
  %1276 = vmatpush2.msra.mxu0 0.0
  %1277 = vmatprep.subr.mxu0 0.0
  %1278 = vmatpush2.msra.mxu0 0.0
  %1279 = vmatprep.subr.mxu0 0.0
  %1280 = vmatpush2.msra.mxu0 0.0
  %1281 = vmatprep.subr.mxu0 0.0
  %1282 = vmatpush2.msra.mxu0 0.0
  %1283 = vmatprep.subr.mxu0 0.0
  %1284 = vmatpush2.msra.mxu0 0.0
  %1285 = vmatprep.subr.mxu0 0.0
  %1286 = vmatpush2.msra.mxu0 0.0
  %1287 = vmatprep.subr.mxu0 0.0
  %1288 = vmatpush2.msra.mxu0 0.0
  %1289 = vmatprep.subr.mxu0 0.0
  %1290 = vmatpush2.msra.mxu0 0.0
  %1291 = vmatprep.subr.mxu0 0.0
  %1292 = vmatpush2.msra.mxu0 0.0
  %1293 = vmatprep.subr.mxu0 0.0
  %1294 = vmatpush2.msra.mxu0 0.0
  %1295 = vmatprep.subr.mxu0 0.0
  %1296 = vmatpush2.msra.mxu0 0.0
  %1297 = vmatprep.mubr.f32.mxu0 0.0
  %v1298 = vand.u32 %v932, 4294901760
  %v1299 = vsub.f32 %v932, %v1298
  %v1300 = vand.u32 %v1299, 4294901760
  %1301 = vmatmul.mubr.f32.gmra.mxu0 %v1300
  %v1302 = vpop.f32.mrf.mxu0
  %v1303 = vadd.f32 %v1221, %v1302
  %v1304 = vpop.f32.mrf.mxu0
  %v1305 = vadd.f32 %v1223, %v1304
  %1306 = vdwg.mxu0
  %1307 = vmatprep.subr.mxu0 0.0
  %1308 = vmatpush1.msra.mxu0 0.0
  %1309 = vmatprep.subr.mxu0 0.0
  %1310 = vmatpush1.msra.mxu0 0.0
  %1311 = vmatprep.subr.mxu0 0.0
  %1312 = vmatpush1.msra.mxu0 0.0
  %1313 = vmatprep.subr.mxu0 0.0
  %1314 = vmatpush1.msra.mxu0 0.0
  %1315 = vmatprep.subr.mxu0 0.0
  %1316 = vmatpush1.msra.mxu0 0.0
  %1317 = vmatprep.subr.mxu0 0.0
  %1318 = vmatpush1.msra.mxu0 0.0
  %1319 = vmatprep.subr.mxu0 0.0
  %1320 = vmatpush1.msra.mxu0 0.0
  %1321 = vmatprep.subr.mxu0 0.0
  %1322 = vmatpush1.msra.mxu0 0.0
  %1323 = vmatprep.subr.mxu0 0.0
  %1324 = vmatpush1.msra.mxu0 0.0
  %1325 = vmatprep.subr.mxu0 0.0
  %1326 = vmatpush1.msra.mxu0 0.0
  %1327 = vmatprep.subr.mxu0 0.0
  %1328 = vmatpush1.msra.mxu0 0.0
  %1329 = vmatprep.subr.mxu0 0.0
  %1330 = vmatpush1.msra.mxu0 0.0
  %v1331 = vand.u32 %v938, 4294901760
  %v1332 = vsub.f32 %v938, %v1331
  %v1333 = vand.u32 %v1332, 4294901760
  %1334 = vmatprep.subr.mxu0 %v1333
  %v1335 = vand.u32 %v935, 4294901760
  %v1336 = vsub.f32 %v935, %v1335
  %v1337 = vand.u32 %v1336, 4294901760
  %1338 = vmatpush1.msra.mxu0 %v1337
  %v1339 = vand.u32 %v928, 4294901760
  %v1340 = vsub.f32 %v928, %v1339
  %v1341 = vand.u32 %v1340, 4294901760
  %1342 = vmatprep.subr.mxu0 %v1341
  %v1343 = vand.u32 %v927, 4294901760
  %v1344 = vsub.f32 %v927, %v1343
  %v1345 = vand.u32 %v1344, 4294901760
  %1346 = vmatpush1.msra.mxu0 %v1345
  %v1347 = vand.u32 %v926, 4294901760
  %v1348 = vsub.f32 %v926, %v1347
  %v1349 = vand.u32 %v1348, 4294901760
  %1350 = vmatprep.subr.mxu0 %v1349
  %v1351 = vand.u32 %v925, 4294901760
  %v1352 = vsub.f32 %v925, %v1351
  %v1353 = vand.u32 %v1352, 4294901760
  %1354 = vmatpush1.msra.mxu0 %v1353
  %v1355 = vand.u32 %v924, 4294901760
  %v1356 = vsub.f32 %v924, %v1355
  %v1357 = vand.u32 %v1356, 4294901760
  %1358 = vmatprep.subr.mxu0 %v1357
  %v1359 = vand.u32 %v923, 4294901760
  %v1360 = vsub.f32 %v923, %v1359
  %v1361 = vand.u32 %v1360, 4294901760
  %1362 = vmatpush1.msra.mxu0 %v1361
  %1363 = vmatprep.subr.mxu0 0.0
  %1364 = vmatpush2.msra.mxu0 0.0
  %1365 = vmatprep.subr.mxu0 0.0
  %1366 = vmatpush2.msra.mxu0 0.0
  %1367 = vmatprep.subr.mxu0 0.0
  %1368 = vmatpush2.msra.mxu0 0.0
  %1369 = vmatprep.subr.mxu0 0.0
  %1370 = vmatpush2.msra.mxu0 0.0
  %1371 = vmatprep.subr.mxu0 0.0
  %1372 = vmatpush2.msra.mxu0 0.0
  %1373 = vmatprep.subr.mxu0 0.0
  %1374 = vmatpush2.msra.mxu0 0.0
  %1375 = vmatprep.subr.mxu0 0.0
  %1376 = vmatpush2.msra.mxu0 0.0
  %1377 = vmatprep.subr.mxu0 0.0
  %1378 = vmatpush2.msra.mxu0 0.0
  %1379 = vmatprep.subr.mxu0 0.0
  %1380 = vmatpush2.msra.mxu0 0.0
  %1381 = vmatprep.subr.mxu0 0.0
  %1382 = vmatpush2.msra.mxu0 0.0
  %1383 = vmatprep.subr.mxu0 0.0
  %1384 = vmatpush2.msra.mxu0 0.0
  %1385 = vmatprep.subr.mxu0 0.0
  %1386 = vmatpush2.msra.mxu0 0.0
  %1387 = vmatprep.subr.mxu0 0.0
  %1388 = vmatpush2.msra.mxu0 0.0
  %1389 = vmatprep.subr.mxu0 0.0
  %1390 = vmatpush2.msra.mxu0 0.0
  %1391 = vmatprep.subr.mxu0 0.0
  %1392 = vmatpush2.msra.mxu0 0.0
  %1393 = vmatprep.subr.mxu0 0.0
  %1394 = vmatpush2.msra.mxu0 0.0
  %1395 = vmatprep.mubr.f32.mxu0 0.0
  %v1396 = vand.u32 %v932, 4294901760
  %1397 = vmatmul.mubr.f32.gmra.mxu0 %v1396
  %v1398 = vpop.f32.mrf.mxu0
  %v1399 = vadd.f32 %v1303, %v1398
  %v1400 = vpop.f32.mrf.mxu0
  %v1401 = vadd.f32 %v1305, %v1400
  %1402 = vdwg.mxu0
  %1403 = vmatprep.subr.mxu0 0.0
  %1404 = vmatpush1.msra.mxu0 0.0
  %1405 = vmatprep.subr.mxu0 0.0
  %1406 = vmatpush1.msra.mxu0 0.0
  %1407 = vmatprep.subr.mxu0 0.0
  %1408 = vmatpush1.msra.mxu0 0.0
  %1409 = vmatprep.subr.mxu0 0.0
  %1410 = vmatpush1.msra.mxu0 0.0
  %1411 = vmatprep.subr.mxu0 0.0
  %1412 = vmatpush1.msra.mxu0 0.0
  %1413 = vmatprep.subr.mxu0 0.0
  %1414 = vmatpush1.msra.mxu0 0.0
  %1415 = vmatprep.subr.mxu0 0.0
  %1416 = vmatpush1.msra.mxu0 0.0
  %1417 = vmatprep.subr.mxu0 0.0
  %1418 = vmatpush1.msra.mxu0 0.0
  %1419 = vmatprep.subr.mxu0 0.0
  %1420 = vmatpush1.msra.mxu0 0.0
  %1421 = vmatprep.subr.mxu0 0.0
  %1422 = vmatpush1.msra.mxu0 0.0
  %1423 = vmatprep.subr.mxu0 0.0
  %1424 = vmatpush1.msra.mxu0 0.0
  %1425 = vmatprep.subr.mxu0 0.0
  %1426 = vmatpush1.msra.mxu0 0.0
  %v1427 = vand.u32 %v938, 4294901760
  %1428 = vmatprep.subr.mxu0 %v1427
  %v1429 = vand.u32 %v935, 4294901760
  %1430 = vmatpush1.msra.mxu0 %v1429
  %v1431 = vand.u32 %v928, 4294901760
  %1432 = vmatprep.subr.mxu0 %v1431
  %v1433 = vand.u32 %v927, 4294901760
  %1434 = vmatpush1.msra.mxu0 %v1433
  %v1435 = vand.u32 %v926, 4294901760
  %1436 = vmatprep.subr.mxu0 %v1435
  %v1437 = vand.u32 %v925, 4294901760
  %1438 = vmatpush1.msra.mxu0 %v1437
  %v1439 = vand.u32 %v924, 4294901760
  %1440 = vmatprep.subr.mxu0 %v1439
  %v1441 = vand.u32 %v923, 4294901760
  %1442 = vmatpush1.msra.mxu0 %v1441
  %1443 = vmatprep.subr.mxu0 0.0
  %1444 = vmatpush2.msra.mxu0 0.0
  %1445 = vmatprep.subr.mxu0 0.0
  %1446 = vmatpush2.msra.mxu0 0.0
  %1447 = vmatprep.subr.mxu0 0.0
  %1448 = vmatpush2.msra.mxu0 0.0
  %1449 = vmatprep.subr.mxu0 0.0
  %1450 = vmatpush2.msra.mxu0 0.0
  %1451 = vmatprep.subr.mxu0 0.0
  %1452 = vmatpush2.msra.mxu0 0.0
  %1453 = vmatprep.subr.mxu0 0.0
  %1454 = vmatpush2.msra.mxu0 0.0
  %1455 = vmatprep.subr.mxu0 0.0
  %1456 = vmatpush2.msra.mxu0 0.0
  %1457 = vmatprep.subr.mxu0 0.0
  %1458 = vmatpush2.msra.mxu0 0.0
  %1459 = vmatprep.subr.mxu0 0.0
  %1460 = vmatpush2.msra.mxu0 0.0
  %1461 = vmatprep.subr.mxu0 0.0
  %1462 = vmatpush2.msra.mxu0 0.0
  %1463 = vmatprep.subr.mxu0 0.0
  %1464 = vmatpush2.msra.mxu0 0.0
  %1465 = vmatprep.subr.mxu0 0.0
  %1466 = vmatpush2.msra.mxu0 0.0
  %1467 = vmatprep.subr.mxu0 0.0
  %1468 = vmatpush2.msra.mxu0 0.0
  %1469 = vmatprep.subr.mxu0 0.0
  %1470 = vmatpush2.msra.mxu0 0.0
  %1471 = vmatprep.subr.mxu0 0.0
  %1472 = vmatpush2.msra.mxu0 0.0
  %1473 = vmatprep.subr.mxu0 0.0
  %1474 = vmatpush2.msra.mxu0 0.0
  %1475 = vmatprep.mubr.f32.mxu0 0.0
  %v1476 = vand.u32 %v932, 4294901760
  %1477 = vmatmul.mubr.f32.gmra.mxu0 %v1476
  %v1478 = vpop.f32.mrf.mxu0
  %v1479 = vadd.f32 %v1399, %v1478
  %v1480 = vpop.f32.mrf.mxu0
  %v1481 = vadd.f32 %v1401, %v1480
  %1482 = vdwg.mxu0
  %s1483 = scalar_lea.vmem %s2, 16
  %1484 = vst [vmem:[%s1483] sm:$0x3f] %v1479
  %1485 = vst [vmem:[%s1483 + $0x8] sm:$0x3f] %v1481
  // Predicated region
  $region10: #{tpu_custom_call.1} parent=0 // pred_check
    _
  $region11: #{tpu_custom_call.1} parent=0 // pred_check_branch
    %1487 = sbr.rel (0) target = $region13
  $region12: #{tpu_custom_call.1} parent=0 // pred_region
    _
  $region13: #{tpu_custom_call.1} parent=0 // pred_fallthru
    _
  // Predicated region
  $region14: #{tpu_custom_call.1} parent=0 // pred_check
    _
  $region15: #{tpu_custom_call.1} parent=0 // pred_check_branch
    %1489 = sbr.rel (0) target = $region17
  $region16: #{tpu_custom_call.1} parent=0 // pred_region
    _
  $region17: #{tpu_custom_call.1} parent=0 // pred_fallthru
    _

</llo_original>
